<compile_context>
chip_gen: v5e
topology: v5e:2x2
jax: 0.10.0
libtpu: 0.0.40
codegen_flags: <defaults>
</compile_context>

<pallas_src>
import functools

import jax
import jax.numpy as jnp
from jax.experimental import pallas as pl
from jax.experimental.pallas import tpu as pltpu


# ----------------------------- config (stand-in for `cfg`) -------------------
class cfg:
    NUM_CLASSES = 2
    resize_width = 32
    resize_height = 32


def _round_up(x, m):
    return (x + m - 1) // m * m


# ----------------------------- Pallas matmul kernel --------------------------
def _mm_bias_kernel(a_ref, w_ref, b_ref, o_ref, *, relu):
    acc = jnp.dot(a_ref[...], w_ref[...], preferred_element_type=jnp.float32)
    acc = acc + b_ref[...]
    if relu:
        acc = jnp.maximum(acc, 0.0)
    o_ref[...] = acc.astype(o_ref.dtype)


def pallas_matmul(a, w, b, relu=False, tm=256):
    """(M,K) @ (K,N) + b, optional ReLU.  M-tiled parallel grid, bf16 MXU."""
    M, K = a.shape
    Kw, N = w.shape
    assert K == Kw
    tm = min(tm, _round_up(M, 8))
    Mp = _round_up(M, tm)
    if Mp != M:
        a = jnp.pad(a, ((0, Mp - M), (0, 0)))
    a16 = a.astype(jnp.bfloat16)            # bf16 MXU inputs (all generations)
    w16 = w.astype(jnp.bfloat16)
    b2 = b.reshape(1, N).astype(jnp.float32)  # epilogue stays f32 (v5e VPU)

    out = pl.pallas_call(
        functools.partial(_mm_bias_kernel, relu=relu),
        out_shape=jax.ShapeDtypeStruct((Mp, N), jnp.float32),
        grid=(Mp // tm,),
        in_specs=[
            pl.BlockSpec((tm, K), lambda i: (i, 0)),
            pl.BlockSpec((K, N), lambda i: (0, 0)),
            pl.BlockSpec((1, N), lambda i: (0, 0)),
        ],
        out_specs=pl.BlockSpec((tm, N), lambda i: (i, 0)),
        compiler_params=pltpu.CompilerParams(
            dimension_semantics=("parallel",)),
    )(a16, w16, b2)
    return out[:M] if Mp != M else out


# ----------------------------- Pallas MultiBox loss kernel --------------------
def _multibox_loss_kernel(gt_ref, pcnt_ref, loc_ref, conf_ref, pri_ref, out_ref):
    # gt_ref:   SMEM (B, 4)   per-sample GT box (x0, y0, x1, y1)
    # pcnt_ref: SMEM (2,)     number of valid priors per pyramid level
    # loc_ref:  VMEM (4, P)   predicted offsets, lane axis = priors
    # conf_ref: VMEM (C, P)   class logits
    # pri_ref:  VMEM (4, P)   priors (cx, cy, w, h), padded lanes have w=h=1
    # out_ref:  VMEM (1, 128) lane0 = loss_l, lane1 = loss_c
    b = pl.program_id(0)
    lvl = pl.program_id(1)

    P = loc_ref.shape[1]
    loc = loc_ref[...]
    conf = conf_ref[...]
    pr = pri_ref[...]

    lane = jax.lax.broadcasted_iota(jnp.int32, (1, P), 1)
    valid = (lane < pcnt_ref[lvl]).astype(jnp.float32)         # (1, P)

    pcx = pr[0:1, :]
    pcy = pr[1:2, :]
    pw = pr[2:3, :]
    ph = pr[3:4, :]
    px0 = pcx - 0.5 * pw
    px1 = pcx + 0.5 * pw
    py0 = pcy - 0.5 * ph
    py1 = pcy + 0.5 * ph

    gx0 = gt_ref[b, 0]
    gy0 = gt_ref[b, 1]
    gx1 = gt_ref[b, 2]
    gy1 = gt_ref[b, 3]

    # IoU of each prior with the single GT box.
    ix0 = jnp.maximum(px0, gx0)
    iy0 = jnp.maximum(py0, gy0)
    ix1 = jnp.minimum(px1, gx1)
    iy1 = jnp.minimum(py1, gy1)
    iw = jnp.maximum(ix1 - ix0, 0.0)
    ih = jnp.maximum(iy1 - iy0, 0.0)
    inter = iw * ih
    area_p = (px1 - px0) * (py1 - py0)
    area_g = (gx1 - gx0) * (gy1 - gy0)
    iou = inter * pl.reciprocal(area_p + area_g - inter + 1e-9, approx=True)
    iou = iou * valid                                           # (1, P)

    best = jnp.max(iou, keepdims=True)                          # (1, 1)
    # Guard: if the GT box overlaps no prior, do not mark everything positive.
    pos = jnp.logical_or(iou > 0.35,
                         jnp.logical_and(best > 0.0, iou >= best - 1e-6))
    posf = pos.astype(jnp.float32) * valid
    num_pos = jnp.maximum(jnp.sum(posf, keepdims=True), 1.0)    # (1, 1)
    inv_np = pl.reciprocal(num_pos, approx=True)

    # Encode GT relative to priors (SSD-style, variances 0.1 / 0.2).
    gcx = 0.5 * (gx0 + gx1)
    gcy = 0.5 * (gy0 + gy1)
    gw = jnp.maximum(gx1 - gx0, 1e-6)
    gh = jnp.maximum(gy1 - gy0, 1e-6)
    t_cx = (gcx - pcx) * pl.reciprocal(0.1 * pw, approx=True)
    t_cy = (gcy - pcy) * pl.reciprocal(0.1 * ph, approx=True)
    t_w = jnp.log(gw * pl.reciprocal(pw, approx=True)) * 5.0    # / 0.2
    t_h = jnp.log(gh * pl.reciprocal(ph, approx=True)) * 5.0
    tgt = jnp.concatenate([t_cx, t_cy, t_w, t_h], axis=0)       # (4, P)

    # Smooth L1 localization loss over positives.
    d = jnp.abs(loc - tgt)
    sl1 = jnp.where(d < 1.0, 0.5 * d * d, d - 0.5)
    loss_l = jnp.sum(sl1 * posf, keepdims=True) * inv_np        # (1, 1)

    # Softmax cross entropy over the class (sublane) axis.
    m = jnp.max(conf, axis=0, keepdims=True)                    # (1, P)
    lse = m + jnp.log(jnp.sum(jnp.exp(conf - m), axis=0, keepdims=True))
    chosen = jnp.where(pos, conf[1:2, :], conf[0:1, :])
    ce = (lse - chosen) * valid
    # TODO(synk): MultiBoxLoss 3:1 hard-negative mining (sort/select of negative
    # losses) is omitted; all negatives contribute, normalized by num_pos.
    loss_c = jnp.sum(ce, keepdims=True) * inv_np                # (1, 1)

    lane_out = jax.lax.broadcasted_iota(jnp.int32, (1, 128), 1)
    out_ref[...] = (jnp.where(lane_out == 0, loss_l, 0.0)
                    + jnp.where(lane_out == 1, loss_c, 0.0))


def multibox_loss_batched(loc_all, conf_all, pri_all, pcnt, gt):
    """One fused loss call over all B samples and both pyramid levels.

    loc_all:  (B, 2, 4, P)   conf_all: (B, 2, C, P)
    pri_all:  (2, 4, P)      pcnt: (2,) int32    gt: (B, 4)
    Returns (loss_l, loss_c), each (B, 2).
    """
    B, L, _, P = loc_all.shape
    C = conf_all.shape[2]
    out = pl.pallas_call(
        _multibox_loss_kernel,
        out_shape=jax.ShapeDtypeStruct((B, L, 1, 128), jnp.float32),
        grid=(B, L),
        in_specs=[
            pl.BlockSpec(memory_space=pltpu.MemorySpace.SMEM),   # gt (B,4)
            pl.BlockSpec(memory_space=pltpu.MemorySpace.SMEM),   # pcnt (2,)
            pl.BlockSpec((None, None, 4, P), lambda b, l: (b, l, 0, 0)),
            pl.BlockSpec((None, None, C, P), lambda b, l: (b, l, 0, 0)),
            pl.BlockSpec((None, 4, P), lambda b, l: (l, 0, 0)),
        ],
        out_specs=pl.BlockSpec((None, None, 1, 128), lambda b, l: (b, l, 0, 0)),
        compiler_params=pltpu.CompilerParams(
            dimension_semantics=("parallel", "parallel")),
    )(gt.astype(jnp.float32), pcnt.astype(jnp.int32),
      loc_all.astype(jnp.float32), conf_all.astype(jnp.float32),
      pri_all.astype(jnp.float32))
    return out[:, :, 0, 0], out[:, :, 0, 1]


# ----------------------------- glue: batched conv via im2col + Pallas GEMM ----
def conv3x3_batched(x, w, b, relu=True):
    # x: (B, H, W, C) NHWC ; w: (9*C, Cout)
    # TODO(synk): im2col is built in the JAX wrapper (9x activation copies);
    # at real DSFD resolutions it should be fused into the GEMM via a taps axis.
    B, H, W, C = x.shape
    xp = jnp.pad(x, ((0, 0), (1, 1), (1, 1), (0, 0)))
    patches = [xp[:, dy:dy + H, dx:dx + W, :] for dy in range(3) for dx in range(3)]
    a = jnp.concatenate(patches, axis=-1).reshape(B * H * W, 9 * C)
    y = pallas_matmul(a, w, b, relu=relu)
    return y.reshape(B, H, W, -1)


def maxpool2(x):
    B, H, W, C = x.shape
    return x.reshape(B, H // 2, 2, W // 2, 2, C).max(axis=(2, 4))


def make_priors(fh, fw, H, W, scale):
    sy = H / fh
    sx = W / fw
    ys = (jnp.arange(fh, dtype=jnp.float32) + 0.5) * sy / H
    xs = (jnp.arange(fw, dtype=jnp.float32) + 0.5) * sx / W
    cy, cx = jnp.meshgrid(ys, xs, indexing="ij")
    wv = jnp.full_like(cx, min(scale * sx / W, 1.0))
    hv = jnp.full_like(cy, min(scale * sy / H, 1.0))
    return jnp.stack([cx, cy, wv, hv], axis=-1).reshape(-1, 4)


def build_priors(H, W):
    """Priors depend only on cfg; built once, lane-dense (level, 4, Pmax)."""
    pri1 = make_priors(H // 2, W // 2, H, W, scale=4.0)          # (P1, 4)
    pri2 = make_priors(H // 4, W // 4, H, W, scale=4.0)          # (P2, 4)
    P1, P2 = pri1.shape[0], pri2.shape[0]
    # Padding priors get w=h=1 so the box encoding stays finite; they are
    # masked out of the loss by the per-level prior count.
    pad = jnp.tile(jnp.array([[0.5, 0.5, 1.0, 1.0]], jnp.float32), (P1 - P2, 1))
    pri2p = jnp.concatenate([pri2, pad], axis=0)
    pri_all = jnp.stack([pri1.T, pri2p.T], axis=0)               # (2, 4, P1)
    pcnt = jnp.array([P1, P2], jnp.int32)
    return pri_all, pcnt


def init_params(key):
    ks = jax.random.split(key, 6)
    C1, C2, NC = 16, 32, cfg.NUM_CLASSES

    def nrm(k, shape, fan_in):
        return jax.random.normal(k, shape, jnp.float32) / jnp.sqrt(fan_in)

    return {
        "w1": nrm(ks[0], (9 * 3, C1), 27.0), "b1": jnp.zeros((C1,), jnp.float32),
        "w2": nrm(ks[1], (9 * C1, C2), 9.0 * C1), "b2": jnp.zeros((C2,), jnp.float32),
        "wl1": nrm(ks[2], (C1, 4), float(C1)), "bl1": jnp.zeros((4,), jnp.float32),
        "wc1": nrm(ks[3], (C1, NC), float(C1)), "bc1": jnp.zeros((NC,), jnp.float32),
        "wl2": nrm(ks[4], (C2, 4), float(C2)), "bl2": jnp.zeros((4,), jnp.float32),
        "wc2": nrm(ks[5], (C2, NC), float(C2)), "bc2": jnp.zeros((NC,), jnp.float32),
    }


def net_forward_batched(x, params):
    """x: (B, H, W, 3) NHWC -> (loc_all (B,2,4,P), conf_all (B,2,NC,P))."""
    B = x.shape[0]
    NC = cfg.NUM_CLASSES

    h1 = conv3x3_batched(x, params["w1"], params["b1"], relu=True)
    f1 = maxpool2(h1)                                   # (B, H/2, W/2, 16)
    h2 = conv3x3_batched(f1, params["w2"], params["b2"], relu=True)
    f2 = maxpool2(h2)                                   # (B, H/4, W/4, 32)

    C1, C2 = f1.shape[-1], f2.shape[-1]
    P1 = f1.shape[1] * f1.shape[2]
    P2 = f2.shape[1] * f2.shape[2]
    f1r = f1.reshape(B * P1, C1)
    f2r = f2.reshape(B * P2, C2)

    # One block-diagonal GEMM for all 4 heads of both levels; the per-level
    # biases are folded in as extra weight rows via a ones-column.
    a_heads = jnp.concatenate([
        jnp.concatenate([f1r, jnp.ones((B * P1, 1), jnp.float32),
                         jnp.zeros((B * P1, C2 + 1), jnp.float32)], axis=1),
        jnp.concatenate([jnp.zeros((B * P2, C1 + 1), jnp.float32),
                         f2r, jnp.ones((B * P2, 1), jnp.float32)], axis=1),
    ], axis=0)                                           # (B*(P1+P2), C1+C2+2)
    w_heads = jnp.concatenate([
        jnp.concatenate([params["wl1"], params["wc1"]], axis=1),
        jnp.concatenate([params["bl1"], params["bc1"]])[None, :],
        jnp.concatenate([params["wl2"], params["wc2"]], axis=1),
        jnp.concatenate([params["bl2"], params["bc2"]])[None, :],
    ], axis=0)                                           # (C1+C2+2, 4+NC)
    ho = pallas_matmul(a_heads, w_heads,
                       jnp.zeros((4 + NC,), jnp.float32), relu=False)

    o1 = ho[:B * P1].reshape(B, P1, 4 + NC)
    o2 = ho[B * P1:].reshape(B, P2, 4 + NC)
    loc1 = jnp.transpose(o1[:, :, :4], (0, 2, 1))        # (B, 4, P1) lane-dense
    conf1 = jnp.transpose(o1[:, :, 4:], (0, 2, 1))       # (B, NC, P1)
    loc2 = jnp.transpose(o2[:, :, :4], (0, 2, 1))        # (B, 4, P2)
    conf2 = jnp.transpose(o2[:, :, 4:], (0, 2, 1))

    pad = P1 - P2
    loc2p = jnp.pad(loc2, ((0, 0), (0, 0), (0, pad)))
    conf2p = jnp.pad(conf2, ((0, 0), (0, 0), (0, pad)))
    loc_all = jnp.stack([loc1, loc2p], axis=1)           # (B, 2, 4, P1)
    conf_all = jnp.stack([conf1, conf2p], axis=1)        # (B, 2, NC, P1)
    return loc_all, conf_all


def warp_to_canvas(face_chw, position, H, W):
    """Fixed-canvas equivalent of interpolate(size=(fh,fw)) + replicate pad + crop.

    face_chw: (3, Hf, Wf); position: (4,) normalized (x0, y0, x1, y1).
    """
    # TODO(synk): PyTorch rounds fw/fh/fx/fy via .item() into *tensor shapes*
    # (data-dependent shapes); here the same geometry is applied as a continuous
    # bilinear warp onto a fixed (H, W) canvas.
    x0, y0, x1, y1 = position[0], position[1], position[2], position[3]
    fw = jnp.maximum(jnp.round((x1 - x0) * W * 2.0), 1.0)
    fh = jnp.maximum(jnp.round((y1 - y0) * H * 2.0), 1.0)
    fx = jnp.round(x0 * W - 0.25 * fw)
    fy = jnp.round(y0 * H - 0.05 * fh)
    Hf, Wf = face_chw.shape[1], face_chw.shape[2]

    cx = jnp.arange(W, dtype=jnp.float32)
    cy = jnp.arange(H, dtype=jnp.float32)
    u = jnp.clip(cx - fx, 0.0, fw - 1.0)               # replicate pad == clamp
    v = jnp.clip(cy - fy, 0.0, fh - 1.0)
    src_x = jnp.clip((u + 0.5) * Wf / fw - 0.5, 0.0, Wf - 1.0)
    src_y = jnp.clip((v + 0.5) * Hf / fh - 0.5, 0.0, Hf - 1.0)

    x0i = jnp.floor(src_x).astype(jnp.int32)
    y0i = jnp.floor(src_y).astype(jnp.int32)
    x1i = jnp.minimum(x0i + 1, Wf - 1)
    y1i = jnp.minimum(y0i + 1, Hf - 1)
    ax = (src_x - x0i.astype(jnp.float32)).reshape(1, 1, W)
    ay = (src_y - y0i.astype(jnp.float32)).reshape(1, H, 1)

    def g(yi, xi):
        return face_chw[:, yi[:, None], xi[None, :]]    # (3, H, W)

    f00 = g(y0i, x0i)
    f01 = g(y0i, x1i)
    f10 = g(y1i, x0i)
    f11 = g(y1i, x1i)
    top = f00 * (1.0 - ax) + f01 * ax
    bot = f10 * (1.0 - ax) + f11 * ax
    out = top * (1.0 - ay) + bot * ay                   # (3, H, W)
    return jnp.transpose(out, (1, 2, 0))                # (H, W, 3) NHWC


def detection_loss(faces, positions, params, pri_all, pcnt):
    # faces: (B, 3, Hf, Wf) NCHW ; positions: (B, 4) normalized xyxy
    H, W = cfg.resize_height, cfg.resize_width
    canvases = jax.vmap(lambda f, p: warp_to_canvas(f, p, H, W))(faces, positions)
    loc_all, conf_all = net_forward_batched(canvases, params)     # batched net
    loss_l, loss_c = multibox_loss_batched(loc_all, conf_all, pri_all, pcnt,
                                           positions)             # (B, 2) each
    # per-sample: loss_l_pal1 + loss_c_pal1 + loss_l_pal2 + loss_c_pal2
    per_sample = jnp.sum(loss_l + loss_c, axis=1)
    return jnp.mean(per_sample)


if __name__ == "__main__":
    key = jax.random.PRNGKey(0)
    k_faces, k_pos, k_params = jax.random.split(key, 3)

    B = 2
    faces = jax.random.uniform(k_faces, (B, 3, 16, 16), dtype=jnp.float32)
    p = jax.random.uniform(k_pos, (B, 4), minval=0.15, maxval=0.35,
                           dtype=jnp.float32)
    positions = jnp.stack(
        [p[:, 0], p[:, 1], p[:, 0] + 0.25 + p[:, 2], p[:, 1] + 0.25 + p[:, 3]],
        axis=1)                                          # valid xyxy boxes in (0,1)

    params = init_params(k_params)
    pri_all, pcnt = build_priors(cfg.resize_height, cfg.resize_width)  # hoisted

    loss_fn = jax.jit(detection_loss)
    loss = loss_fn(faces, positions, params, pri_all, pcnt)
    jax.block_until_ready(loss)
    assert jnp.isfinite(loss)
    print("KERNEL_OK")
</pallas_src>

<mosaic_0001>
module attributes {stable_mosaic.version = 11 : i64} {
  func.func @_mm_bias_kernel(%arg0: i32, %arg1: memref<256x27xbf16, #tpu.memory_space<vmem>>, %arg2: memref<27x16xbf16, #tpu.memory_space<vmem>>, %arg3: memref<1x16xf32, #tpu.memory_space<vmem>>, %arg4: memref<256x16xf32, #tpu.memory_space<vmem>>) attributes {dimension_semantics = [#tpu.dimension_semantics<parallel>], iteration_bounds = array<i64: 8>, scalar_prefetch = 0 : i64, scratch_operands = 0 : i64, tpu.core_type = #tpu.core_type<tc>, window_params = [{transform_indices = @transform_0, window_bounds = array<i64: 256, 27>}, {pipeline_mode = #tpu.pipeline_mode<synchronous>, transform_indices = @transform_1, window_bounds = array<i64: 27, 16>}, {pipeline_mode = #tpu.pipeline_mode<synchronous>, transform_indices = @transform_2, window_bounds = array<i64: 1, 16>}, {transform_indices = @transform_3, window_bounds = array<i64: 256, 16>}]} {
    %c0 = arith.constant 0 : index
    %c0_0 = arith.constant 0 : index
    %0 = vector.load %arg1[%c0, %c0_0] : memref<256x27xbf16, #tpu.memory_space<vmem>>, vector<256x27xbf16>
    %c0_1 = arith.constant 0 : index
    %c0_2 = arith.constant 0 : index
    %1 = vector.load %arg2[%c0_1, %c0_2] : memref<27x16xbf16, #tpu.memory_space<vmem>>, vector<27x16xbf16>
    %cst = arith.constant dense<0.000000e+00> : vector<256x16xf32>
    %2 = tpu.matmul %0, %1, %cst {dimension_numbers = #tpu.dot_dimension_numbers<[1], [0], [0], [1], [0, 0, 1, 1], [], []>} : vector<256x27xbf16>, vector<27x16xbf16>, vector<256x16xf32> -> vector<256x16xf32>
    %c0_3 = arith.constant 0 : index
    %c0_4 = arith.constant 0 : index
    %3 = vector.load %arg3[%c0_3, %c0_4] : memref<1x16xf32, #tpu.memory_space<vmem>>, vector<1x16xf32>
    %4 = vector.broadcast %3 : vector<1x16xf32> to vector<256x16xf32>
    %5 = arith.addf %2, %4 : vector<256x16xf32>
    %cst_5 = arith.constant 0.000000e+00 : f32
    %6 = vector.broadcast %cst_5 : f32 to vector<256x16xf32>
    %7 = arith.maximumf %5, %6 : vector<256x16xf32>
    %c0_6 = arith.constant 0 : index
    %c0_7 = arith.constant 0 : index
    %8 = vector.load %arg4[%c0_6, %c0_7] : memref<256x16xf32, #tpu.memory_space<vmem>>, vector<256x16xf32>
    tpu.vector_store %arg4[%c0_6, %c0_7], %7 {strides = array<i32>} : memref<256x16xf32, #tpu.memory_space<vmem>>, vector<256x16xf32>,
    return
  }
  func.func @transform_0(%arg0: i32) -> (i32, i32) {
    %c0_i32 = arith.constant 0 : i32
    %c0_i32_0 = arith.constant 0 : i32
    return %arg0, %c0_i32 : i32, i32
  }
  func.func @transform_1(%arg0: i32) -> (i32, i32) {
    %c0_i32 = arith.constant 0 : i32
    %c0_i32_0 = arith.constant 0 : i32
    %c0_i32_1 = arith.constant 0 : i32
    return %c0_i32, %c0_i32_0 : i32, i32
  }
  func.func @transform_2(%arg0: i32) -> (i32, i32) {
    %c0_i32 = arith.constant 0 : i32
    %c0_i32_0 = arith.constant 0 : i32
    %c0_i32_1 = arith.constant 0 : i32
    return %c0_i32, %c0_i32_0 : i32, i32
  }
  func.func @transform_3(%arg0: i32) -> (i32, i32) {
    %c0_i32 = arith.constant 0 : i32
    %c0_i32_0 = arith.constant 0 : i32
    return %arg0, %c0_i32 : i32, i32
  }
}

module attributes {stable_mosaic.version = 11 : i64} {
  func.func @_mm_bias_kernel(%arg0: i32, %arg1: memref<256x144xbf16, #tpu.memory_space<vmem>>, %arg2: memref<144x32xbf16, #tpu.memory_space<vmem>>, %arg3: memref<1x32xf32, #tpu.memory_space<vmem>>, %arg4: memref<256x32xf32, #tpu.memory_space<vmem>>) attributes {dimension_semantics = [#tpu.dimension_semantics<parallel>], iteration_bounds = array<i64: 2>, scalar_prefetch = 0 : i64, scratch_operands = 0 : i64, tpu.core_type = #tpu.core_type<tc>, window_params = [{transform_indices = @transform_0, window_bounds = array<i64: 256, 144>}, {pipeline_mode = #tpu.pipeline_mode<synchronous>, transform_indices = @transform_1, window_bounds = array<i64: 144, 32>}, {pipeline_mode = #tpu.pipeline_mode<synchronous>, transform_indices = @transform_2, window_bounds = array<i64: 1, 32>}, {transform_indices = @transform_3, window_bounds = array<i64: 256, 32>}]} {
    %c0 = arith.constant 0 : index
    %c0_0 = arith.constant 0 : index
    %0 = vector.load %arg1[%c0, %c0_0] : memref<256x144xbf16, #tpu.memory_space<vmem>>, vector<256x144xbf16>
    %c0_1 = arith.constant 0 : index
    %c0_2 = arith.constant 0 : index
    %1 = vector.load %arg2[%c0_1, %c0_2] : memref<144x32xbf16, #tpu.memory_space<vmem>>, vector<144x32xbf16>
    %cst = arith.constant dense<0.000000e+00> : vector<256x32xf32>
    %2 = tpu.matmul %0, %1, %cst {dimension_numbers = #tpu.dot_dimension_numbers<[1], [0], [0], [1], [0, 0, 1, 1], [], []>} : vector<256x144xbf16>, vector<144x32xbf16>, vector<256x32xf32> -> vector<256x32xf32>
    %c0_3 = arith.constant 0 : index
    %c0_4 = arith.constant 0 : index
    %3 = vector.load %arg3[%c0_3, %c0_4] : memref<1x32xf32, #tpu.memory_space<vmem>>, vector<1x32xf32>
    %4 = vector.broadcast %3 : vector<1x32xf32> to vector<256x32xf32>
    %5 = arith.addf %2, %4 : vector<256x32xf32>
    %cst_5 = arith.constant 0.000000e+00 : f32
    %6 = vector.broadcast %cst_5 : f32 to vector<256x32xf32>
    %7 = arith.maximumf %5, %6 : vector<256x32xf32>
    %c0_6 = arith.constant 0 : index
    %c0_7 = arith.constant 0 : index
    %8 = vector.load %arg4[%c0_6, %c0_7] : memref<256x32xf32, #tpu.memory_space<vmem>>, vector<256x32xf32>
    tpu.vector_store %arg4[%c0_6, %c0_7], %7 {strides = array<i32>} : memref<256x32xf32, #tpu.memory_space<vmem>>, vector<256x32xf32>,
    return
  }
  func.func @transform_0(%arg0: i32) -> (i32, i32) {
    %c0_i32 = arith.constant 0 : i32
    %c0_i32_0 = arith.constant 0 : i32
    return %arg0, %c0_i32 : i32, i32
  }
  func.func @transform_1(%arg0: i32) -> (i32, i32) {
    %c0_i32 = arith.constant 0 : i32
    %c0_i32_0 = arith.constant 0 : i32
    %c0_i32_1 = arith.constant 0 : i32
    return %c0_i32, %c0_i32_0 : i32, i32
  }
  func.func @transform_2(%arg0: i32) -> (i32, i32) {
    %c0_i32 = arith.constant 0 : i32
    %c0_i32_0 = arith.constant 0 : i32
    %c0_i32_1 = arith.constant 0 : i32
    return %c0_i32, %c0_i32_0 : i32, i32
  }
  func.func @transform_3(%arg0: i32) -> (i32, i32) {
    %c0_i32 = arith.constant 0 : i32
    %c0_i32_0 = arith.constant 0 : i32
    return %arg0, %c0_i32 : i32, i32
  }
}

module attributes {stable_mosaic.version = 11 : i64} {
  func.func @_mm_bias_kernel(%arg0: i32, %arg1: memref<256x50xbf16, #tpu.memory_space<vmem>>, %arg2: memref<50x6xbf16, #tpu.memory_space<vmem>>, %arg3: memref<1x6xf32, #tpu.memory_space<vmem>>, %arg4: memref<256x6xf32, #tpu.memory_space<vmem>>) attributes {dimension_semantics = [#tpu.dimension_semantics<parallel>], iteration_bounds = array<i64: 3>, scalar_prefetch = 0 : i64, scratch_operands = 0 : i64, tpu.core_type = #tpu.core_type<tc>, window_params = [{transform_indices = @transform_0, window_bounds = array<i64: 256, 50>}, {pipeline_mode = #tpu.pipeline_mode<synchronous>, transform_indices = @transform_1, window_bounds = array<i64: 50, 6>}, {pipeline_mode = #tpu.pipeline_mode<synchronous>, transform_indices = @transform_2, window_bounds = array<i64: 1, 6>}, {transform_indices = @transform_3, window_bounds = array<i64: 256, 6>}]} {
    %c0 = arith.constant 0 : index
    %c0_0 = arith.constant 0 : index
    %0 = vector.load %arg1[%c0, %c0_0] : memref<256x50xbf16, #tpu.memory_space<vmem>>, vector<256x50xbf16>
    %c0_1 = arith.constant 0 : index
    %c0_2 = arith.constant 0 : index
    %1 = vector.load %arg2[%c0_1, %c0_2] : memref<50x6xbf16, #tpu.memory_space<vmem>>, vector<50x6xbf16>
    %cst = arith.constant dense<0.000000e+00> : vector<256x6xf32>
    %2 = tpu.matmul %0, %1, %cst {dimension_numbers = #tpu.dot_dimension_numbers<[1], [0], [0], [1], [0, 0, 1, 1], [], []>} : vector<256x50xbf16>, vector<50x6xbf16>, vector<256x6xf32> -> vector<256x6xf32>
    %c0_3 = arith.constant 0 : index
    %c0_4 = arith.constant 0 : index
    %3 = vector.load %arg3[%c0_3, %c0_4] : memref<1x6xf32, #tpu.memory_space<vmem>>, vector<1x6xf32>
    %4 = vector.broadcast %3 : vector<1x6xf32> to vector<256x6xf32>
    %5 = arith.addf %2, %4 : vector<256x6xf32>
    %c0_5 = arith.constant 0 : index
    %c0_6 = arith.constant 0 : index
    %6 = vector.load %arg4[%c0_5, %c0_6] : memref<256x6xf32, #tpu.memory_space<vmem>>, vector<256x6xf32>
    tpu.vector_store %arg4[%c0_5, %c0_6], %5 {strides = array<i32>} : memref<256x6xf32, #tpu.memory_space<vmem>>, vector<256x6xf32>,
    return
  }
  func.func @transform_0(%arg0: i32) -> (i32, i32) {
    %c0_i32 = arith.constant 0 : i32
    %c0_i32_0 = arith.constant 0 : i32
    return %arg0, %c0_i32 : i32, i32
  }
  func.func @transform_1(%arg0: i32) -> (i32, i32) {
    %c0_i32 = arith.constant 0 : i32
    %c0_i32_0 = arith.constant 0 : i32
    %c0_i32_1 = arith.constant 0 : i32
    return %c0_i32, %c0_i32_0 : i32, i32
  }
  func.func @transform_2(%arg0: i32) -> (i32, i32) {
    %c0_i32 = arith.constant 0 : i32
    %c0_i32_0 = arith.constant 0 : i32
    %c0_i32_1 = arith.constant 0 : i32
    return %c0_i32, %c0_i32_0 : i32, i32
  }
  func.func @transform_3(%arg0: i32) -> (i32, i32) {
    %c0_i32 = arith.constant 0 : i32
    %c0_i32_0 = arith.constant 0 : i32
    return %arg0, %c0_i32 : i32, i32
  }
}

module attributes {stable_mosaic.version = 11 : i64} {
  func.func @_multibox_loss_kernel(%arg0: i32, %arg1: i32, %arg2: memref<2x4xf32, #tpu.memory_space<smem>>, %arg3: memref<2xi32, #tpu.memory_space<smem>>, %arg4: memref<1x1x4x256xf32, #tpu.memory_space<vmem>>, %arg5: memref<1x1x2x256xf32, #tpu.memory_space<vmem>>, %arg6: memref<1x4x256xf32, #tpu.memory_space<vmem>>, %arg7: memref<1x1x1x128xf32, #tpu.memory_space<vmem>>) attributes {dimension_semantics = [#tpu.dimension_semantics<parallel>, #tpu.dimension_semantics<parallel>], iteration_bounds = array<i64: 2, 2>, scalar_prefetch = 0 : i64, scratch_operands = 0 : i64, tpu.core_type = #tpu.core_type<tc>, window_params = [{transform_indices = @transform_0, window_bounds = array<i64: 2, 4>}, {transform_indices = @transform_1, window_bounds = array<i64: 2>}, {transform_indices = @transform_2, window_bounds = array<i64: 1, 1, 4, 256>}, {transform_indices = @transform_3, window_bounds = array<i64: 1, 1, 2, 256>}, {transform_indices = @transform_4, window_bounds = array<i64: 1, 4, 256>}, {transform_indices = @transform_5, window_bounds = array<i64: 1, 1, 1, 128>}]} {
    %c0 = arith.constant 0 : index
    %c0_0 = arith.constant 0 : index
    %c0_1 = arith.constant 0 : index
    %c0_2 = arith.constant 0 : index
    %0 = vector.load %arg4[%c0, %c0_0, %c0_1, %c0_2] : memref<1x1x4x256xf32, #tpu.memory_space<vmem>>, vector<1x1x4x256xf32>
    %1 = vector.shape_cast %0 : vector<1x1x4x256xf32> to vector<4x256xf32>
    %c0_3 = arith.constant 0 : index
    %c0_4 = arith.constant 0 : index
    %c0_5 = arith.constant 0 : index
    %c0_6 = arith.constant 0 : index
    %2 = vector.load %arg5[%c0_3, %c0_4, %c0_5, %c0_6] : memref<1x1x2x256xf32, #tpu.memory_space<vmem>>, vector<1x1x2x256xf32>
    %3 = vector.shape_cast %2 : vector<1x1x2x256xf32> to vector<2x256xf32>
    %c0_7 = arith.constant 0 : index
    %c0_8 = arith.constant 0 : index
    %c0_9 = arith.constant 0 : index
    %4 = vector.load %arg6[%c0_7, %c0_8, %c0_9] : memref<1x4x256xf32, #tpu.memory_space<vmem>>, vector<1x4x256xf32>
    %5 = vector.shape_cast %4 : vector<1x4x256xf32> to vector<4x256xf32>
    %6 = tpu.iota {dimensions = array<i32: 1>} : vector<1x256xi32>
    %7 = arith.index_cast %arg1 : i32 to index
    %8 = memref.load %arg3[%7] : memref<2xi32, #tpu.memory_space<smem>>
    %9 = vector.broadcast %8 : i32 to vector<1x256xi32>
    %10 = arith.cmpi slt, %6, %9 : vector<1x256xi32>
    %11 = arith.extui %10 : vector<1x256xi1> to vector<1x256xi32>
    %12 = arith.sitofp %11 : vector<1x256xi32> to vector<1x256xf32>
    %13 = vector.extract_strided_slice %5 {offsets = [0, 0], sizes = [1, 256], strides = [1, 1]} : vector<4x256xf32> to vector<1x256xf32>
    %14 = vector.extract_strided_slice %5 {offsets = [1, 0], sizes = [1, 256], strides = [1, 1]} : vector<4x256xf32> to vector<1x256xf32>
    %15 = vector.extract_strided_slice %5 {offsets = [2, 0], sizes = [1, 256], strides = [1, 1]} : vector<4x256xf32> to vector<1x256xf32>
    %16 = vector.extract_strided_slice %5 {offsets = [3, 0], sizes = [1, 256], strides = [1, 1]} : vector<4x256xf32> to vector<1x256xf32>
    %cst = arith.constant 5.000000e-01 : f32
    %17 = vector.broadcast %cst : f32 to vector<1x256xf32>
    %18 = arith.mulf %17, %15 : vector<1x256xf32>
    %19 = arith.subf %13, %18 : vector<1x256xf32>
    %cst_10 = arith.constant 5.000000e-01 : f32
    %20 = vector.broadcast %cst_10 : f32 to vector<1x256xf32>
    %21 = arith.mulf %20, %15 : vector<1x256xf32>
    %22 = arith.addf %13, %21 : vector<1x256xf32>
    %cst_11 = arith.constant 5.000000e-01 : f32
    %23 = vector.broadcast %cst_11 : f32 to vector<1x256xf32>
    %24 = arith.mulf %23, %16 : vector<1x256xf32>
    %25 = arith.subf %14, %24 : vector<1x256xf32>
    %cst_12 = arith.constant 5.000000e-01 : f32
    %26 = vector.broadcast %cst_12 : f32 to vector<1x256xf32>
    %27 = arith.mulf %26, %16 : vector<1x256xf32>
    %28 = arith.addf %14, %27 : vector<1x256xf32>
    %29 = arith.index_cast %arg0 : i32 to index
    %c0_13 = arith.constant 0 : index
    %30 = memref.load %arg2[%29, %c0_13] : memref<2x4xf32, #tpu.memory_space<smem>>
    %31 = arith.index_cast %arg0 : i32 to index
    %c1 = arith.constant 1 : index
    %32 = memref.load %arg2[%31, %c1] : memref<2x4xf32, #tpu.memory_space<smem>>
    %33 = arith.index_cast %arg0 : i32 to index
    %c2 = arith.constant 2 : index
    %34 = memref.load %arg2[%33, %c2] : memref<2x4xf32, #tpu.memory_space<smem>>
    %35 = arith.index_cast %arg0 : i32 to index
    %c3 = arith.constant 3 : index
    %36 = memref.load %arg2[%35, %c3] : memref<2x4xf32, #tpu.memory_space<smem>>
    %37 = vector.broadcast %30 : f32 to vector<1x256xf32>
    %38 = arith.maximumf %19, %37 : vector<1x256xf32>
    %39 = vector.broadcast %32 : f32 to vector<1x256xf32>
    %40 = arith.maximumf %25, %39 : vector<1x256xf32>
    %41 = vector.broadcast %34 : f32 to vector<1x256xf32>
    %42 = arith.minimumf %22, %41 : vector<1x256xf32>
    %43 = vector.broadcast %36 : f32 to vector<1x256xf32>
    %44 = arith.minimumf %28, %43 : vector<1x256xf32>
    %45 = arith.subf %42, %38 : vector<1x256xf32>
    %cst_14 = arith.constant 0.000000e+00 : f32
    %46 = vector.broadcast %cst_14 : f32 to vector<1x256xf32>
    %47 = arith.maximumf %45, %46 : vector<1x256xf32>
    %48 = arith.subf %44, %40 : vector<1x256xf32>
    %cst_15 = arith.constant 0.000000e+00 : f32
    %49 = vector.broadcast %cst_15 : f32 to vector<1x256xf32>
    %50 = arith.maximumf %48, %49 : vector<1x256xf32>
    %51 = arith.mulf %47, %50 : vector<1x256xf32>
    %52 = arith.subf %22, %19 : vector<1x256xf32>
    %53 = arith.subf %28, %25 : vector<1x256xf32>
    %54 = arith.mulf %52, %53 : vector<1x256xf32>
    %55 = arith.subf %34, %30 : f32
    %56 = arith.subf %36, %32 : f32
    %57 = arith.mulf %55, %56 : f32
    %58 = vector.broadcast %57 : f32 to vector<1x256xf32>
    %59 = arith.addf %54, %58 : vector<1x256xf32>
    %60 = arith.subf %59, %51 : vector<1x256xf32>
    %cst_16 = arith.constant 9.99999971E-10 : f32
    %61 = vector.broadcast %cst_16 : f32 to vector<1x256xf32>
    %62 = arith.addf %60, %61 : vector<1x256xf32>
    %63 = tpu.reciprocal %62 {approx = true} : vector<1x256xf32> -> vector<1x256xf32>
    %64 = arith.mulf %51, %63 : vector<1x256xf32>
    %65 = arith.mulf %64, %12 : vector<1x256xf32>
    %66 = vector.shape_cast %65 : vector<1x256xf32> to vector<1x1x256xf32>
    %cst_17 = arith.constant dense<0xFF800000> : vector<1xf32>
    %67 = vector.multi_reduction <maximumf>, %66, %cst_17 [1, 2] : vector<1x1x256xf32> to vector<1xf32>
    %68 = vector.shape_cast %67 : vector<1xf32> to vector<1x1x1xf32>
    %69 = vector.extract %68[0, 0, 0] : f32 from vector<1x1x1xf32>
    %70 = vector.broadcast %69 : f32 to vector<1x1xf32>
    %cst_18 = arith.constant 3.500000e-01 : f32
    %71 = vector.broadcast %cst_18 : f32 to vector<1x256xf32>
    %72 = arith.cmpf ogt, %65, %71 : vector<1x256xf32>
    %cst_19 = arith.constant 0.000000e+00 : f32
    %73 = vector.broadcast %cst_19 : f32 to vector<1x1xf32>
    %74 = arith.cmpf ogt, %70, %73 : vector<1x1xf32>
    %cst_20 = arith.constant 9.99999997E-7 : f32
    %75 = vector.broadcast %cst_20 : f32 to vector<1x1xf32>
    %76 = arith.subf %70, %75 : vector<1x1xf32>
    %77 = vector.broadcast %76 : vector<1x1xf32> to vector<1x256xf32>
    %78 = arith.cmpf oge, %65, %77 : vector<1x256xf32>
    %79 = vector.broadcast %74 : vector<1x1xi1> to vector<1x256xi1>
    %80 = arith.andi %79, %78 : vector<1x256xi1>
    %81 = arith.ori %72, %80 : vector<1x256xi1>
    %82 = arith.extui %81 : vector<1x256xi1> to vector<1x256xi32>
    %83 = arith.sitofp %82 : vector<1x256xi32> to vector<1x256xf32>
    %84 = arith.mulf %83, %12 : vector<1x256xf32>
    %85 = vector.shape_cast %84 : vector<1x256xf32> to vector<1x1x256xf32>
    %cst_21 = arith.constant dense<0.000000e+00> : vector<1xf32>
    %86 = vector.multi_reduction <add>, %85, %cst_21 [1, 2] : vector<1x1x256xf32> to vector<1xf32>
    %87 = vector.shape_cast %86 : vector<1xf32> to vector<1x1x1xf32>
    %88 = vector.extract %87[0, 0, 0] : f32 from vector<1x1x1xf32>
    %89 = vector.broadcast %88 : f32 to vector<1x1xf32>
    %cst_22 = arith.constant 1.000000e+00 : f32
    %90 = vector.broadcast %cst_22 : f32 to vector<1x1xf32>
    %91 = arith.maximumf %89, %90 : vector<1x1xf32>
    %92 = tpu.reciprocal %91 {approx = true} : vector<1x1xf32> -> vector<1x1xf32>
    %93 = arith.addf %30, %34 : f32
    %cst_23 = arith.constant 5.000000e-01 : f32
    %94 = arith.mulf %cst_23, %93 : f32
    %95 = arith.addf %32, %36 : f32
    %cst_24 = arith.constant 5.000000e-01 : f32
    %96 = arith.mulf %cst_24, %95 : f32
    %97 = arith.subf %34, %30 : f32
    %cst_25 = arith.constant 9.99999997E-7 : f32
    %98 = arith.maximumf %97, %cst_25 : f32
    %99 = arith.subf %36, %32 : f32
    %cst_26 = arith.constant 9.99999997E-7 : f32
    %100 = arith.maximumf %99, %cst_26 : f32
    %101 = vector.broadcast %94 : f32 to vector<1x256xf32>
    %102 = arith.subf %101, %13 : vector<1x256xf32>
    %cst_27 = arith.constant 1.000000e-01 : f32
    %103 = vector.broadcast %cst_27 : f32 to vector<1x256xf32>
    %104 = arith.mulf %103, %15 : vector<1x256xf32>
    %105 = tpu.reciprocal %104 {approx = true} : vector<1x256xf32> -> vector<1x256xf32>
    %106 = arith.mulf %102, %105 : vector<1x256xf32>
    %107 = vector.broadcast %96 : f32 to vector<1x256xf32>
    %108 = arith.subf %107, %14 : vector<1x256xf32>
    %cst_28 = arith.constant 1.000000e-01 : f32
    %109 = vector.broadcast %cst_28 : f32 to vector<1x256xf32>
    %110 = arith.mulf %109, %16 : vector<1x256xf32>
    %111 = tpu.reciprocal %110 {approx = true} : vector<1x256xf32> -> vector<1x256xf32>
    %112 = arith.mulf %108, %111 : vector<1x256xf32>
    %113 = tpu.reciprocal %15 {approx = true} : vector<1x256xf32> -> vector<1x256xf32>
    %114 = vector.broadcast %98 : f32 to vector<1x256xf32>
    %115 = arith.mulf %114, %113 : vector<1x256xf32>
    %116 = math.log %115 : vector<1x256xf32>
    %cst_29 = arith.constant 5.000000e+00 : f32
    %117 = vector.broadcast %cst_29 : f32 to vector<1x256xf32>
    %118 = arith.mulf %116, %117 : vector<1x256xf32>
    %119 = tpu.reciprocal %16 {approx = true} : vector<1x256xf32> -> vector<1x256xf32>
    %120 = vector.broadcast %100 : f32 to vector<1x256xf32>
    %121 = arith.mulf %120, %119 : vector<1x256xf32>
    %122 = math.log %121 : vector<1x256xf32>
    %cst_30 = arith.constant 5.000000e+00 : f32
    %123 = vector.broadcast %cst_30 : f32 to vector<1x256xf32>
    %124 = arith.mulf %122, %123 : vector<1x256xf32>
    %125 = tpu.concatenate %106, %112, %118, %124 in 0 : vector<1x256xf32>, vector<1x256xf32>, vector<1x256xf32>, vector<1x256xf32> -> vector<4x256xf32>
    %126 = arith.subf %1, %125 : vector<4x256xf32>
    %127 = math.absf %126 : vector<4x256xf32>
    %cst_31 = arith.constant 1.000000e+00 : f32
    %128 = vector.broadcast %cst_31 : f32 to vector<4x256xf32>
    %129 = arith.cmpf olt, %127, %128 : vector<4x256xf32>
    %cst_32 = arith.constant 5.000000e-01 : f32
    %130 = vector.broadcast %cst_32 : f32 to vector<4x256xf32>
    %131 = arith.mulf %130, %127 : vector<4x256xf32>
    %132 = arith.mulf %131, %127 : vector<4x256xf32>
    %cst_33 = arith.constant 5.000000e-01 : f32
    %133 = vector.broadcast %cst_33 : f32 to vector<4x256xf32>
    %134 = arith.subf %127, %133 : vector<4x256xf32>
    %135 = arith.select %129, %132, %134 : vector<4x256xi1>, vector<4x256xf32>
    %136 = vector.broadcast %84 : vector<1x256xf32> to vector<4x256xf32>
    %137 = arith.mulf %135, %136 : vector<4x256xf32>
    %138 = vector.shape_cast %137 : vector<4x256xf32> to vector<1x4x256xf32>
    %cst_34 = arith.constant dense<0.000000e+00> : vector<1xf32>
    %139 = vector.multi_reduction <add>, %138, %cst_34 [1, 2] : vector<1x4x256xf32> to vector<1xf32>
    %140 = vector.shape_cast %139 : vector<1xf32> to vector<1x1x1xf32>
    %141 = vector.extract %140[0, 0, 0] : f32 from vector<1x1x1xf32>
    %142 = vector.broadcast %141 : f32 to vector<1x1xf32>
    %143 = arith.mulf %142, %92 : vector<1x1xf32>
    %cst_35 = arith.constant dense<0xFF800000> : vector<256xf32>
    %144 = vector.multi_reduction <maximumf>, %3, %cst_35 [0] : vector<2x256xf32> to vector<256xf32>
    %145 = vector.shape_cast %144 : vector<256xf32> to vector<1x256xf32>
    %146 = vector.broadcast %145 : vector<1x256xf32> to vector<2x256xf32>
    %147 = arith.subf %3, %146 : vector<2x256xf32>
    %148 = math.exp %147 : vector<2x256xf32>
    %cst_36 = arith.constant dense<0.000000e+00> : vector<256xf32>
    %149 = vector.multi_reduction <add>, %148, %cst_36 [0] : vector<2x256xf32> to vector<256xf32>
    %150 = vector.shape_cast %149 : vector<256xf32> to vector<1x256xf32>
    %151 = math.log %150 : vector<1x256xf32>
    %152 = arith.addf %145, %151 : vector<1x256xf32>
    %153 = vector.extract_strided_slice %3 {offsets = [1, 0], sizes = [1, 256], strides = [1, 1]} : vector<2x256xf32> to vector<1x256xf32>
    %154 = vector.extract_strided_slice %3 {offsets = [0, 0], sizes = [1, 256], strides = [1, 1]} : vector<2x256xf32> to vector<1x256xf32>
    %155 = arith.select %81, %153, %154 : vector<1x256xi1>, vector<1x256xf32>
    %156 = arith.subf %152, %155 : vector<1x256xf32>
    %157 = arith.mulf %156, %12 : vector<1x256xf32>
    %158 = vector.shape_cast %157 : vector<1x256xf32> to vector<1x1x256xf32>
    %cst_37 = arith.constant dense<0.000000e+00> : vector<1xf32>
    %159 = vector.multi_reduction <add>, %158, %cst_37 [1, 2] : vector<1x1x256xf32> to vector<1xf32>
    %160 = vector.shape_cast %159 : vector<1xf32> to vector<1x1x1xf32>
    %161 = vector.extract %160[0, 0, 0] : f32 from vector<1x1x1xf32>
    %162 = vector.broadcast %161 : f32 to vector<1x1xf32>
    %163 = arith.mulf %162, %92 : vector<1x1xf32>
    %164 = tpu.iota {dimensions = array<i32: 1>} : vector<1x128xi32>
    %c0_i32 = arith.constant 0 : i32
    %165 = vector.broadcast %c0_i32 : i32 to vector<1x128xi32>
    %166 = arith.cmpi eq, %164, %165 : vector<1x128xi32>
    %cst_38 = arith.constant 0.000000e+00 : f32
    %167 = vector.shape_cast %143 : vector<1x1xf32> to vector<1x1xf32>
    %168 = vector.broadcast %167 : vector<1x1xf32> to vector<1x128xf32>
    %169 = vector.broadcast %cst_38 : f32 to vector<1x128xf32>
    %170 = arith.select %166, %168, %169 : vector<1x128xi1>, vector<1x128xf32>
    %c1_i32 = arith.constant 1 : i32
    %171 = vector.broadcast %c1_i32 : i32 to vector<1x128xi32>
    %172 = arith.cmpi eq, %164, %171 : vector<1x128xi32>
    %cst_39 = arith.constant 0.000000e+00 : f32
    %173 = vector.shape_cast %163 : vector<1x1xf32> to vector<1x1xf32>
    %174 = vector.broadcast %173 : vector<1x1xf32> to vector<1x128xf32>
    %175 = vector.broadcast %cst_39 : f32 to vector<1x128xf32>
    %176 = arith.select %172, %174, %175 : vector<1x128xi1>, vector<1x128xf32>
    %177 = arith.addf %170, %176 : vector<1x128xf32>
    %c0_40 = arith.constant 0 : index
    %c0_41 = arith.constant 0 : index
    %c0_42 = arith.constant 0 : index
    %c0_43 = arith.constant 0 : index
    %178 = vector.load %arg7[%c0_40, %c0_41, %c0_42, %c0_43] : memref<1x1x1x128xf32, #tpu.memory_space<vmem>>, vector<1x1x1x128xf32>
    %179 = vector.shape_cast %178 : vector<1x1x1x128xf32> to vector<1x128xf32>
    %180 = vector.shape_cast %177 : vector<1x128xf32> to vector<1x1x1x128xf32>
    tpu.vector_store %arg7[%c0_40, %c0_41, %c0_42, %c0_43], %180 {strides = array<i32>} : memref<1x1x1x128xf32, #tpu.memory_space<vmem>>, vector<1x1x1x128xf32>,
    return
  }
  func.func @transform_0(%arg0: i32, %arg1: i32) -> (i32, i32) {
    %c0_i32 = arith.constant 0 : i32
    %c0_i32_0 = arith.constant 0 : i32
    %c0_i32_1 = arith.constant 0 : i32
    return %c0_i32, %c0_i32_0 : i32, i32
  }
  func.func @transform_1(%arg0: i32, %arg1: i32) -> i32 {
    %c0_i32 = arith.constant 0 : i32
    %c0_i32_0 = arith.constant 0 : i32
    return %c0_i32 : i32
  }
  func.func @transform_2(%arg0: i32, %arg1: i32) -> (i32, i32, i32, i32) {
    %c0_i32 = arith.constant 0 : i32
    %c0_i32_0 = arith.constant 0 : i32
    %c0_i32_1 = arith.constant 0 : i32
    return %arg0, %arg1, %c0_i32, %c0_i32_0 : i32, i32, i32, i32
  }
  func.func @transform_3(%arg0: i32, %arg1: i32) -> (i32, i32, i32, i32) {
    %c0_i32 = arith.constant 0 : i32
    %c0_i32_0 = arith.constant 0 : i32
    %c0_i32_1 = arith.constant 0 : i32
    return %arg0, %arg1, %c0_i32, %c0_i32_0 : i32, i32, i32, i32
  }
  func.func @transform_4(%arg0: i32, %arg1: i32) -> (i32, i32, i32) {
    %c0_i32 = arith.constant 0 : i32
    %c0_i32_0 = arith.constant 0 : i32
    %c0_i32_1 = arith.constant 0 : i32
    return %arg1, %c0_i32, %c0_i32_0 : i32, i32, i32
  }
  func.func @transform_5(%arg0: i32, %arg1: i32) -> (i32, i32, i32, i32) {
    %c0_i32 = arith.constant 0 : i32
    %c0_i32_0 = arith.constant 0 : i32
    %c0_i32_1 = arith.constant 0 : i32
    return %arg0, %arg1, %c0_i32, %c0_i32_0 : i32, i32, i32, i32
  }
}

</mosaic_0001>

<llo_original>
// kernel: detection_loss.4
$region0: #{detection_loss.4}
  #allocation0 [shape = 'u32[]', space=smem, size = 0x4, offset = 0x4, fixed_abs, tag = 'smem constant byte address 0x4 - core index']
  #allocation1 [shape = 'u32[72,128]{1,0:T(1,128)}', space=vmem, size = 0x9000, scoped, tag = 'internal scratch']
  %s0 = inlined_call_operand.vmem [shape: bf16[2048,27], index: 0, kind: input, shape index: {}]
  %s1 = inlined_call_operand.vmem [shape: bf16[27,16], index: 1, kind: input, shape index: {}]
  %s2 = inlined_call_operand.vmem [shape: f32[1,16], index: 2, kind: input, shape index: {}]
  %s3 = inlined_call_operand.vmem [shape: f32[2048,16], index: 3, kind: output, shape index: {}]
  %s4 = sld [smem:[#allocation0]]
  $region45: #{detection_loss.4} parent=0
    _
  %s6 = ssub.s32 1, %s4
  %s7 = scalar_select 0, %s6, %s4
  loop: start=0, step=1, limit=10
  $region2: #{detection_loss.4} parent=0 // loop_pre_header
    _
  $region3: #{detection_loss.4} parent=0 // loop_header
    %s9 = sphi 0, %s13
    %p10 = scmp.ge.s32.totalorder %s9, 10
    %s19 = sphi 0, %s21
    %s22 = sphi 0, %s19
    %s23 = sphi 0, %s22
    %s39 = sphi 0, %s23
    %s43 = sphi 0, %s43
    %s45 = sphi 0, %s43
    %s46 = sphi 0, %s45
    %s60 = sphi 0, %s46
    %s64 = sphi 0, %s64
    %s66 = sphi 0, %s64
    %s67 = sphi 0, %s66
    %s81 = sphi 0, %s67
    %s87 = sphi 0, %s89
    %s90 = sphi 0, %s87
    %s91 = sphi 0, %s90
    %s107 = sphi 0, %s91
  $region4: #{detection_loss.4} parent=0 // loop_header_branch
    %12 = sbr.rel (%p10) target = $region8
  $region5: #{detection_loss.4} parent=0 // loop_body
    %s14 = ssub.s32 %s9, 1
    %s15 = ssub.s32 %s9, 2
    %s16 = sadd.s32 %s9, 1
    %s17 = ssub.s32 %s9, %s16
    %p18 = scmp.eq.s32.totalorder %s17, 0
    %s20 = sadd.s32 %s19, 1
    %s21 = scalar_select %p18, %s19, %s20
    %p24 = pneg %p18
    %p25 = scmp.eq.s32.totalorder %s9, 7
    %p26 = por %p24, %p25
    %p27 = scmp.ne.s32.totalorder %s19, %s22
    %p28 = scmp.eq.s32.totalorder %s9, 0
    %p29 = por %p27, %p28
    %p30 = scmp.ne.s32.totalorder %s19, %s22
    %p31 = scmp.eq.s32.totalorder %s14, 7
    %p32 = por %p30, %p31
    %p33 = scmp.ne.s32.totalorder %s22, %s23
    %p34 = scmp.eq.s32.totalorder %s14, 0
    %p35 = por %p33, %p34
    %p36 = scmp.ne.s32.totalorder %s22, %s23
    %p37 = scmp.eq.s32.totalorder %s15, 7
    %p38 = por %p36, %p37
    %p40 = scmp.ne.s32.totalorder %s23, %s39
    %p41 = scmp.eq.s32.totalorder %s15, 0
    %p42 = por %p40, %p41
    %s44 = sadd.s32 %s43, 1
    %p47 = scmp.eq.s32.totalorder %s9, 7
    %p48 = scmp.ne.s32.totalorder %s43, %s45
    %p49 = scmp.eq.s32.totalorder %s9, 0
    %p50 = por %p48, %p49
    %p51 = scmp.ne.s32.totalorder %s43, %s45
    %p52 = scmp.eq.s32.totalorder %s14, 7
    %p53 = por %p51, %p52
    %p54 = scmp.ne.s32.totalorder %s45, %s46
    %p55 = scmp.eq.s32.totalorder %s14, 0
    %p56 = por %p54, %p55
    %p57 = scmp.ne.s32.totalorder %s45, %s46
    %p58 = scmp.eq.s32.totalorder %s15, 7
    %p59 = por %p57, %p58
    %p61 = scmp.ne.s32.totalorder %s46, %s60
    %p62 = scmp.eq.s32.totalorder %s15, 0
    %p63 = por %p61, %p62
    %s65 = sadd.s32 %s64, 1
    %p68 = scmp.eq.s32.totalorder %s9, 7
    %p69 = scmp.ne.s32.totalorder %s64, %s66
    %p70 = scmp.eq.s32.totalorder %s9, 0
    %p71 = por %p69, %p70
    %p72 = scmp.ne.s32.totalorder %s64, %s66
    %p73 = scmp.eq.s32.totalorder %s14, 7
    %p74 = por %p72, %p73
    %p75 = scmp.ne.s32.totalorder %s66, %s67
    %p76 = scmp.eq.s32.totalorder %s14, 0
    %p77 = por %p75, %p76
    %p78 = scmp.ne.s32.totalorder %s66, %s67
    %p79 = scmp.eq.s32.totalorder %s15, 7
    %p80 = por %p78, %p79
    %p82 = scmp.ne.s32.totalorder %s67, %s81
    %p83 = scmp.eq.s32.totalorder %s15, 0
    %p84 = por %p82, %p83
    %s85 = ssub.s32 %s9, %s16
    %p86 = scmp.eq.s32.totalorder %s85, 0
    %s88 = sadd.s32 %s87, 1
    %s89 = scalar_select %p86, %s87, %s88
    %p92 = pneg %p86
    %p93 = scmp.eq.s32.totalorder %s9, 7
    %p94 = por %p92, %p93
    %p95 = scmp.ne.s32.totalorder %s87, %s90
    %p96 = scmp.eq.s32.totalorder %s9, 0
    %p97 = por %p95, %p96
    %p98 = scmp.ne.s32.totalorder %s87, %s90
    %p99 = scmp.eq.s32.totalorder %s14, 7
    %p100 = por %p98, %p99
    %p101 = scmp.ne.s32.totalorder %s90, %s91
    %p102 = scmp.eq.s32.totalorder %s14, 0
    %p103 = por %p101, %p102
    %p104 = scmp.ne.s32.totalorder %s90, %s91
    %p105 = scmp.eq.s32.totalorder %s15, 7
    %p106 = por %p104, %p105
    %p108 = scmp.ne.s32.totalorder %s91, %s107
    %p109 = scmp.eq.s32.totalorder %s15, 0
    %p110 = por %p108, %p109
    %p111 = scmp.le.s32.totalorder 1, %s9
    %p112 = scmp.lt.s32.totalorder %s9, 9
    %p113 = pnand %p111, %p112
    %p114 = pneg %p113
    // Predicated region
    $region9: #{detection_loss.4} parent=5 // pred_check
      _
    $region10: #{detection_loss.4} parent=5 // pred_check_branch
      %116 = sbr.rel (%p113) target = $region12
    $region11: #{detection_loss.4} parent=5 // pred_region
      %s117 = ssub.s32 %s9, 1
      // Predicated region
      $region13: #{detection_loss.4} parent=11 // pred_check
        %p118 = pneg %p56
      $region14: #{detection_loss.4} parent=11 // pred_check_branch
        %120 = sbr.rel (%p118) target = $region16
      $region15: #{detection_loss.4} parent=11 // pred_region
        _
      $region16: #{detection_loss.4} parent=11 // pred_fallthru
        _
      // Predicated region
      $region17: #{detection_loss.4} parent=11 // pred_check
        %p121 = pneg %p77
      $region18: #{detection_loss.4} parent=11 // pred_check_branch
        %123 = sbr.rel (%p121) target = $region20
      $region19: #{detection_loss.4} parent=11 // pred_region
        _
      $region20: #{detection_loss.4} parent=11 // pred_fallthru
        _
    $region12: #{detection_loss.4} parent=5 // pred_fallthru
      _
    %p124 = scmp.lt.s32.totalorder %s9, 8
    // Predicated region
    $region21: #{detection_loss.4} parent=5 // pred_check
      %p125 = pneg %p124
    $region22: #{detection_loss.4} parent=5 // pred_check_branch
      %127 = sbr.rel (%p125) target = $region24
    $region23: #{detection_loss.4} parent=5 // pred_region
      // Predicated region
      $region25: #{detection_loss.4} parent=23 // pred_check
        %p128 = pneg %p29
      $region26: #{detection_loss.4} parent=23 // pred_check_branch
        %130 = sbr.rel (%p128) target = $region28
      $region27: #{detection_loss.4} parent=23 // pred_region
        %s131 = smul.u32 32, %s9
        %p132 = scmp.lt.s32.totalorder %s131, 255
        %s133 = scalar_select %p132, %s131, 255
        %s134 = smul.addr %s133, 4
        %s135 = scalar_lea.vmem %s0, %s134
        %s136 = smul.u32 32, %s9
      $region28: #{detection_loss.4} parent=23 // pred_fallthru
        _
    $region24: #{detection_loss.4} parent=5 // pred_fallthru
      _
    %p137 = scmp.le.s32.totalorder 1, %s9
    %p138 = scmp.lt.s32.totalorder %s9, 9
    %p139 = pnand %p137, %p138
    %p140 = pneg %p139
    // Predicated region
    $region29: #{detection_loss.4} parent=5 // pred_check
      _
    $region30: #{detection_loss.4} parent=5 // pred_check_branch
      %142 = sbr.rel (%p139) target = $region32
    $region31: #{detection_loss.4} parent=5 // pred_region
      %s143 = ssub.s32 %s9, 1
      %s144 = smul.u32 32, %s14
      %p145 = scmp.lt.s32.totalorder %s144, 255
      %s146 = scalar_select %p145, %s144, 255
      %s147 = smul.addr %s146, 4
      %s148 = scalar_lea.vmem %s0, %s147
      %p149 = pneg %p35
      %p150 = pneg %p32
      %p151 = pneg %p56
      %p152 = pneg %p53
      %p153 = pneg %p77
      %p154 = pneg %p74
      %p155 = pneg %p103
      %p156 = pneg %p100
      %s157 = smul.u32 32, %s14
      %p158 = scmp.lt.s32.totalorder %s157, 255
      %s159 = scalar_select %p158, %s157, 255
      %s160 = smul.addr %s159, 8
      %s161 = scalar_lea.vmem %s3, %s160
      %s162 = smul.u32 32, %s14
      %p163 = scmp.lt.s32.totalorder %s162, 255
      %s164 = scalar_select %p163, %s162, 255
      %s165 = smul.addr %s164, 4
      %s166 = scalar_lea.vmem %s0, %s165
      %s167 = smul.u32 32, %s14
      %s168 = smul.u32 32, %s14
      %p169 = scmp.lt.s32.totalorder %s168, 255
      %s170 = scalar_select %p169, %s168, 255
      %s171 = smul.addr %s170, 8
      %s172 = scalar_lea.vmem %s3, %s171
      %s173 = smul.u32 32, %s14
      %v175 = vld [vmem:[%s166] sm:$0xf]
      %v176 = vld [vmem:[%s166 + $0x4] sm:$0xf]
      %v177 = vld [vmem:[%s166 + $0x8] sm:$0xf]
      %v178 = vld [vmem:[%s166 + $0xc] sm:$0xf]
      %v179 = vld [vmem:[%s166 + $0x10] sm:$0xf]
      %v180 = vld [vmem:[%s166 + $0x14] sm:$0xf]
      %v181 = vld [vmem:[%s166 + $0x18] sm:$0xf]
      %v182 = vld [vmem:[%s166 + $0x1c] sm:$0xf]
      %v183 = vld [vmem:[%s166 + $0x20] sm:$0xf]
      %v184 = vld [vmem:[%s166 + $0x24] sm:$0xf]
      %v185 = vld [vmem:[%s166 + $0x28] sm:$0xf]
      %v186 = vld [vmem:[%s166 + $0x2c] sm:$0xf]
      %v187 = vld [vmem:[%s166 + $0x30] sm:$0xf]
      %v188 = vld [vmem:[%s166 + $0x34] sm:$0xf]
      %v189 = vld [vmem:[%s166 + $0x38] sm:$0xf]
      %v190 = vld [vmem:[%s166 + $0x3c] sm:$0xf]
      %v191 = vld [vmem:[%s166 + $0x40] sm:$0xf]
      %v192 = vld [vmem:[%s166 + $0x44] sm:$0xf]
      %v193 = vld [vmem:[%s166 + $0x48] sm:$0xf]
      %v194 = vld [vmem:[%s166 + $0x4c] sm:$0xf]
      %v195 = vld [vmem:[%s166 + $0x50] sm:$0xf]
      %v196 = vld [vmem:[%s166 + $0x54] sm:$0xf]
      %v197 = vld [vmem:[%s166 + $0x58] sm:$0xf]
      %v198 = vld [vmem:[%s166 + $0x5c] sm:$0xf]
      %v199 = vld [vmem:[%s166 + $0x60] sm:$0xf]
      %v200 = vld [vmem:[%s166 + $0x64] sm:$0xf]
      %v201 = vld [vmem:[%s166 + $0x68] sm:$0xf]
      %v202 = vld [vmem:[%s166 + $0x6c] sm:$0xf]
      %v203 = vld [vmem:[%s166 + $0x70] sm:$0xf]
      %v204 = vld [vmem:[%s166 + $0x74] sm:$0xf]
      %v205 = vld [vmem:[%s166 + $0x78] sm:$0xf]
      %v206 = vld [vmem:[%s166 + $0x7c] sm:$0xf]
      %v207 = vld [vmem:[%s1] sm:$0xf]
      %v208 = vld [vmem:[%s1 + $0x4] sm:$0xf]
      %v209 = vld [vmem:[%s1 + $0x8] sm:$0xf]
      %v210 = vld [vmem:[%s1 + $0xc] sm:$0x3]
      %v211 = vld [vmem:[%s2] sm:$0x1]
      %v213 = vperm.slane %v211, 0
      %v247 = vunpack.c.l.b16 %v175
      %v248 = vunpack.c.l.b16 %v176
      %v249 = vunpack.c.l.b16 %v177
      %v250 = vunpack.c.l.b16 %v178
      %v251 = vunpack.c.l.b16 %v179
      %v252 = vunpack.c.l.b16 %v180
      %v253 = vunpack.c.l.b16 %v181
      %v254 = vunpack.c.l.b16 %v182
      %v255 = vunpack.c.l.b16 %v183
      %v256 = vunpack.c.l.b16 %v184
      %v257 = vunpack.c.l.b16 %v185
      %v258 = vunpack.c.l.b16 %v186
      %v259 = vunpack.c.l.b16 %v187
      %v260 = vunpack.c.l.b16 %v188
      %v261 = vunpack.c.l.b16 %v189
      %v262 = vunpack.c.l.b16 %v190
      %v263 = vunpack.c.l.b16 %v191
      %v264 = vunpack.c.l.b16 %v192
      %v265 = vunpack.c.l.b16 %v193
      %v266 = vunpack.c.l.b16 %v194
      %v267 = vunpack.c.l.b16 %v195
      %v268 = vunpack.c.l.b16 %v196
      %v269 = vunpack.c.l.b16 %v197
      %v270 = vunpack.c.l.b16 %v198
      %v271 = vunpack.c.l.b16 %v199
      %v272 = vunpack.c.l.b16 %v200
      %v273 = vunpack.c.l.b16 %v201
      %v274 = vunpack.c.l.b16 %v202
      %v275 = vunpack.c.l.b16 %v203
      %v276 = vunpack.c.l.b16 %v204
      %v277 = vunpack.c.l.b16 %v205
      %v278 = vunpack.c.l.b16 %v206
      %v279 = vpack.c.b16 %v248, %v247
      %v280 = vpack.c.b16 %v250, %v249
      %v281 = vpack.c.b16 %v252, %v251
      %v282 = vpack.c.b16 %v254, %v253
      %v283 = vpack.c.b16 %v256, %v255
      %v284 = vpack.c.b16 %v258, %v257
      %v285 = vpack.c.b16 %v260, %v259
      %v286 = vpack.c.b16 %v262, %v261
      %v287 = vpack.c.b16 %v264, %v263
      %v288 = vpack.c.b16 %v266, %v265
      %v289 = vpack.c.b16 %v268, %v267
      %v290 = vpack.c.b16 %v270, %v269
      %v291 = vpack.c.b16 %v272, %v271
      %v292 = vpack.c.b16 %v274, %v273
      %v293 = vpack.c.b16 %v276, %v275
      %v294 = vpack.c.b16 %v278, %v277
      %v299 = vunpack.c.l.b16 %v207
      %v300 = vunpack.c.l.b16 %v208
      %v301 = vunpack.c.l.b16 %v209
      %v302 = vunpack.c.l.b16 %v210
      %v303 = vpack.c.b16 %v300, %v299
      %v304 = vpack.c.b16 %v302, %v301
      %vm306 = vcmask 220160
      %v308 = vsel %vm306, %v279, 0
      %v311 = vsel %vm306, %v280, 0
      %v314 = vsel %vm306, %v281, 0
      %v317 = vsel %vm306, %v282, 0
      %v320 = vsel %vm306, %v283, 0
      %v323 = vsel %vm306, %v284, 0
      %v326 = vsel %vm306, %v285, 0
      %v329 = vsel %vm306, %v286, 0
      %v332 = vsel %vm306, %v287, 0
      %v335 = vsel %vm306, %v288, 0
      %v338 = vsel %vm306, %v289, 0
      %v341 = vsel %vm306, %v290, 0
      %v344 = vsel %vm306, %v291, 0
      %v347 = vsel %vm306, %v292, 0
      %v350 = vsel %vm306, %v293, 0
      %v353 = vsel %vm306, %v294, 0
      %vm355 = vcmask 1044480
      %vm356 = vcmask 1045504
      %v357 = vsel %vm355, 4294967295, 65535
      %v358 = vsel %vm356, %v357, 0
      %v360 = vand.u32 %v304, %v358
      %362 = vmatpush.bf16.msra.mxu0 0
      %363 = vmatpush.bf16.msra.mxu0 0
      %364 = vmatpush.bf16.msra.mxu0 0
      %365 = vmatpush.bf16.msra.mxu0 0
      %366 = vmatpush.bf16.msra.mxu0 0
      %367 = vmatpush.bf16.msra.mxu0 0
      %368 = vmatpush.bf16.msra.mxu0 %v360
      %369 = vmatpush.bf16.msra.mxu0 %v303
      %370 = vmatmul.bf16.gmra.mxu0 %v308
      %v371 = vpop.f32.mrf.mxu0
      %v372 = vadd.f32 %v213, %v371
      %v373 = vpop.f32.mrf.mxu0
      %v374 = vadd.f32 %v213, %v373
      %375 = vmatmul.bf16.gmra.mxu0 %v311
      %v376 = vpop.f32.mrf.mxu0
      %v377 = vadd.f32 %v213, %v376
      %v378 = vpop.f32.mrf.mxu0
      %v379 = vadd.f32 %v213, %v378
      %380 = vmatmul.bf16.gmra.mxu0 %v314
      %v381 = vpop.f32.mrf.mxu0
      %v382 = vadd.f32 %v213, %v381
      %v383 = vpop.f32.mrf.mxu0
      %v384 = vadd.f32 %v213, %v383
      %385 = vmatmul.bf16.gmra.mxu0 %v317
      %v386 = vpop.f32.mrf.mxu0
      %v387 = vadd.f32 %v213, %v386
      %v388 = vpop.f32.mrf.mxu0
      %v389 = vadd.f32 %v213, %v388
      %390 = vmatmul.bf16.gmra.mxu0 %v320
      %v391 = vpop.f32.mrf.mxu0
      %v392 = vadd.f32 %v213, %v391
      %v393 = vpop.f32.mrf.mxu0
      %v394 = vadd.f32 %v213, %v393
      %395 = vmatmul.bf16.gmra.mxu0 %v323
      %v396 = vpop.f32.mrf.mxu0
      %v397 = vadd.f32 %v213, %v396
      %v398 = vpop.f32.mrf.mxu0
      %v399 = vadd.f32 %v213, %v398
      %400 = vmatmul.bf16.gmra.mxu0 %v326
      %v401 = vpop.f32.mrf.mxu0
      %v402 = vadd.f32 %v213, %v401
      %v403 = vpop.f32.mrf.mxu0
      %v404 = vadd.f32 %v213, %v403
      %405 = vmatmul.bf16.gmra.mxu0 %v329
      %v406 = vpop.f32.mrf.mxu0
      %v407 = vadd.f32 %v213, %v406
      %v408 = vpop.f32.mrf.mxu0
      %v409 = vadd.f32 %v213, %v408
      %410 = vmatmul.bf16.gmra.mxu0 %v332
      %v411 = vpop.f32.mrf.mxu0
      %v412 = vadd.f32 %v213, %v411
      %v413 = vpop.f32.mrf.mxu0
      %v414 = vadd.f32 %v213, %v413
      %415 = vmatmul.bf16.gmra.mxu0 %v335
      %v416 = vpop.f32.mrf.mxu0
      %v417 = vadd.f32 %v213, %v416
      %v418 = vpop.f32.mrf.mxu0
      %v419 = vadd.f32 %v213, %v418
      %420 = vmatmul.bf16.gmra.mxu0 %v338
      %v421 = vpop.f32.mrf.mxu0
      %v422 = vadd.f32 %v213, %v421
      %v423 = vpop.f32.mrf.mxu0
      %v424 = vadd.f32 %v213, %v423
      %425 = vmatmul.bf16.gmra.mxu0 %v341
      %v426 = vpop.f32.mrf.mxu0
      %v427 = vadd.f32 %v213, %v426
      %v428 = vpop.f32.mrf.mxu0
      %v429 = vadd.f32 %v213, %v428
      %430 = vmatmul.bf16.gmra.mxu0 %v344
      %v431 = vpop.f32.mrf.mxu0
      %v432 = vadd.f32 %v213, %v431
      %v433 = vpop.f32.mrf.mxu0
      %v434 = vadd.f32 %v213, %v433
      %435 = vmatmul.bf16.gmra.mxu0 %v347
      %v436 = vpop.f32.mrf.mxu0
      %v437 = vadd.f32 %v213, %v436
      %v438 = vpop.f32.mrf.mxu0
      %v439 = vadd.f32 %v213, %v438
      %440 = vmatmul.bf16.gmra.mxu0 %v350
      %v441 = vpop.f32.mrf.mxu0
      %v442 = vadd.f32 %v213, %v441
      %v443 = vpop.f32.mrf.mxu0
      %v444 = vadd.f32 %v213, %v443
      %445 = vmatmul.bf16.gmra.mxu0 %v353
      %v446 = vpop.f32.mrf.mxu0
      %v447 = vadd.f32 %v213, %v446
      %v448 = vpop.f32.mrf.mxu0
      %v449 = vadd.f32 %v213, %v448
      %450 = vdwg.mxu0
      %v451 = vmax.f32 %v372, 0.0
      %v452 = vmax.f32 %v374, 0.0
      %v453 = vmax.f32 %v377, 0.0
      %v454 = vmax.f32 %v379, 0.0
      %v455 = vmax.f32 %v382, 0.0
      %v456 = vmax.f32 %v384, 0.0
      %v457 = vmax.f32 %v387, 0.0
      %v458 = vmax.f32 %v389, 0.0
      %v459 = vmax.f32 %v392, 0.0
      %v460 = vmax.f32 %v394, 0.0
      %v461 = vmax.f32 %v397, 0.0
      %v462 = vmax.f32 %v399, 0.0
      %v463 = vmax.f32 %v402, 0.0
      %v464 = vmax.f32 %v404, 0.0
      %v465 = vmax.f32 %v407, 0.0
      %v466 = vmax.f32 %v409, 0.0
      %v467 = vmax.f32 %v412, 0.0
      %v468 = vmax.f32 %v414, 0.0
      %v469 = vmax.f32 %v417, 0.0
      %v470 = vmax.f32 %v419, 0.0
      %v471 = vmax.f32 %v422, 0.0
      %v472 = vmax.f32 %v424, 0.0
      %v473 = vmax.f32 %v427, 0.0
      %v474 = vmax.f32 %v429, 0.0
      %v475 = vmax.f32 %v432, 0.0
      %v476 = vmax.f32 %v434, 0.0
      %v477 = vmax.f32 %v437, 0.0
      %v478 = vmax.f32 %v439, 0.0
      %v479 = vmax.f32 %v442, 0.0
      %v480 = vmax.f32 %v444, 0.0
      %v481 = vmax.f32 %v447, 0.0
      %v482 = vmax.f32 %v449, 0.0
      %vm483 = vcmask 130048
      %484 = vst.msk [vmem:[%s172] sm:$0xff] %vm483, %v451
      %485 = vst.msk [vmem:[%s172 + $0x8] sm:$0xff] %vm483, %v452
      %486 = vst.msk [vmem:[%s172 + $0x10] sm:$0xff] %vm483, %v453
      %487 = vst.msk [vmem:[%s172 + $0x18] sm:$0xff] %vm483, %v454
      %488 = vst.msk [vmem:[%s172 + $0x20] sm:$0xff] %vm483, %v455
      %489 = vst.msk [vmem:[%s172 + $0x28] sm:$0xff] %vm483, %v456
      %490 = vst.msk [vmem:[%s172 + $0x30] sm:$0xff] %vm483, %v457
      %491 = vst.msk [vmem:[%s172 + $0x38] sm:$0xff] %vm483, %v458
      %492 = vst.msk [vmem:[%s172 + $0x40] sm:$0xff] %vm483, %v459
      %493 = vst.msk [vmem:[%s172 + $0x48] sm:$0xff] %vm483, %v460
      %494 = vst.msk [vmem:[%s172 + $0x50] sm:$0xff] %vm483, %v461
      %495 = vst.msk [vmem:[%s172 + $0x58] sm:$0xff] %vm483, %v462
      %496 = vst.msk [vmem:[%s172 + $0x60] sm:$0xff] %vm483, %v463
      %497 = vst.msk [vmem:[%s172 + $0x68] sm:$0xff] %vm483, %v464
      %498 = vst.msk [vmem:[%s172 + $0x70] sm:$0xff] %vm483, %v465
      %499 = vst.msk [vmem:[%s172 + $0x78] sm:$0xff] %vm483, %v466
      %500 = vst.msk [vmem:[%s172 + $0x80] sm:$0xff] %vm483, %v467
      %501 = vst.msk [vmem:[%s172 + $0x88] sm:$0xff] %vm483, %v468
      %502 = vst.msk [vmem:[%s172 + $0x90] sm:$0xff] %vm483, %v469
      %503 = vst.msk [vmem:[%s172 + $0x98] sm:$0xff] %vm483, %v470
      %504 = vst.msk [vmem:[%s172 + $0xa0] sm:$0xff] %vm483, %v471
      %505 = vst.msk [vmem:[%s172 + $0xa8] sm:$0xff] %vm483, %v472
      %506 = vst.msk [vmem:[%s172 + $0xb0] sm:$0xff] %vm483, %v473
      %507 = vst.msk [vmem:[%s172 + $0xb8] sm:$0xff] %vm483, %v474
      %508 = vst.msk [vmem:[%s172 + $0xc0] sm:$0xff] %vm483, %v475
      %509 = vst.msk [vmem:[%s172 + $0xc8] sm:$0xff] %vm483, %v476
      %510 = vst.msk [vmem:[%s172 + $0xd0] sm:$0xff] %vm483, %v477
      %511 = vst.msk [vmem:[%s172 + $0xd8] sm:$0xff] %vm483, %v478
      %512 = vst.msk [vmem:[%s172 + $0xe0] sm:$0xff] %vm483, %v479
      %513 = vst.msk [vmem:[%s172 + $0xe8] sm:$0xff] %vm483, %v480
      %514 = vst.msk [vmem:[%s172 + $0xf0] sm:$0xff] %vm483, %v481
      %515 = vst.msk [vmem:[%s172 + $0xf8] sm:$0xff] %vm483, %v482
      %s516 = smul.u32 32, %s14
      %p517 = scmp.lt.s32.totalorder %s516, 255
      %s518 = scalar_select %p517, %s516, 255
      %s519 = smul.addr %s518, 8
      %s520 = scalar_lea.vmem %s3, %s519
      // Predicated region
      $region33: #{detection_loss.4} parent=31 // pred_check
        %p521 = pneg %p100
      $region34: #{detection_loss.4} parent=31 // pred_check_branch
        %523 = sbr.rel (%p521) target = $region36
      $region35: #{detection_loss.4} parent=31 // pred_region
        %s524 = smul.u32 32, %s14
      $region36: #{detection_loss.4} parent=31 // pred_fallthru
        _
    $region32: #{detection_loss.4} parent=5 // pred_fallthru
      _
    %p525 = scmp.le.s32.totalorder 2, %s9
    // Predicated region
    $region37: #{detection_loss.4} parent=5 // pred_check
      %p526 = pneg %p525
    $region38: #{detection_loss.4} parent=5 // pred_check_branch
      %528 = sbr.rel (%p526) target = $region40
    $region39: #{detection_loss.4} parent=5 // pred_region
      %s529 = ssub.s32 %s9, 2
      // Predicated region
      $region41: #{detection_loss.4} parent=39 // pred_check
        %p530 = pneg %p106
      $region42: #{detection_loss.4} parent=39 // pred_check_branch
        %532 = sbr.rel (%p530) target = $region44
      $region43: #{detection_loss.4} parent=39 // pred_region
        %s533 = smul.u32 32, %s15
        %p534 = scmp.lt.s32.totalorder %s533, 255
        %s535 = scalar_select %p534, %s533, 255
        %s536 = smul.addr %s535, 8
        %s537 = scalar_lea.vmem %s3, %s536
      $region44: #{detection_loss.4} parent=39 // pred_fallthru
        _
    $region40: #{detection_loss.4} parent=5 // pred_fallthru
      _
  $region6: #{detection_loss.4} parent=0 // loop_footer
    %s13 = sadd.s32 1, %s9
  $region7: #{detection_loss.4} parent=0 // loop_footer_branch
    %8 = sbr.rel target = $region3
  $region8: #{detection_loss.4} parent=0 // loop_exit
    _

// kernel: detection_loss.5
$region0: #{detection_loss.5}
  #allocation0 [shape = 'u32[]', space=smem, size = 0x4, offset = 0x4, fixed_abs, tag = 'smem constant byte address 0x4 - core index']
  #allocation1 [shape = 'u32[72,128]{1,0:T(1,128)}', space=vmem, size = 0x9000, scoped, tag = 'internal scratch']
  %s0 = inlined_call_operand.vmem [shape: bf16[512,144], index: 0, kind: input, shape index: {}]
  %s1 = inlined_call_operand.vmem [shape: bf16[144,32], index: 1, kind: input, shape index: {}]
  %s2 = inlined_call_operand.vmem [shape: f32[1,32], index: 2, kind: input, shape index: {}]
  %s3 = inlined_call_operand.vmem [shape: f32[512,32], index: 3, kind: output, shape index: {}]
  %s4 = sld [smem:[#allocation0]]
  $region45: #{detection_loss.5} parent=0
    _
  %s6 = ssub.s32 1, %s4
  %s7 = scalar_select 0, %s6, %s4
  loop: start=0, step=1, limit=4
  $region2: #{detection_loss.5} parent=0 // loop_pre_header
    _
  $region3: #{detection_loss.5} parent=0 // loop_header
    %s9 = sphi 0, %s13
    %p10 = scmp.ge.s32.totalorder %s9, 4
    %s19 = sphi 0, %s21
    %s22 = sphi 0, %s19
    %s23 = sphi 0, %s22
    %s39 = sphi 0, %s23
    %s43 = sphi 0, %s43
    %s45 = sphi 0, %s43
    %s46 = sphi 0, %s45
    %s60 = sphi 0, %s46
    %s64 = sphi 0, %s64
    %s66 = sphi 0, %s64
    %s67 = sphi 0, %s66
    %s81 = sphi 0, %s67
    %s87 = sphi 0, %s89
    %s90 = sphi 0, %s87
    %s91 = sphi 0, %s90
    %s107 = sphi 0, %s91
  $region4: #{detection_loss.5} parent=0 // loop_header_branch
    %12 = sbr.rel (%p10) target = $region8
  $region5: #{detection_loss.5} parent=0 // loop_body
    %s14 = ssub.s32 %s9, 1
    %s15 = ssub.s32 %s9, 2
    %s16 = sadd.s32 %s9, 1
    %s17 = ssub.s32 %s9, %s16
    %p18 = scmp.eq.s32.totalorder %s17, 0
    %s20 = sadd.s32 %s19, 1
    %s21 = scalar_select %p18, %s19, %s20
    %p24 = pneg %p18
    %p25 = scmp.eq.s32.totalorder %s9, 1
    %p26 = por %p24, %p25
    %p27 = scmp.ne.s32.totalorder %s19, %s22
    %p28 = scmp.eq.s32.totalorder %s9, 0
    %p29 = por %p27, %p28
    %p30 = scmp.ne.s32.totalorder %s19, %s22
    %p31 = scmp.eq.s32.totalorder %s14, 1
    %p32 = por %p30, %p31
    %p33 = scmp.ne.s32.totalorder %s22, %s23
    %p34 = scmp.eq.s32.totalorder %s14, 0
    %p35 = por %p33, %p34
    %p36 = scmp.ne.s32.totalorder %s22, %s23
    %p37 = scmp.eq.s32.totalorder %s15, 1
    %p38 = por %p36, %p37
    %p40 = scmp.ne.s32.totalorder %s23, %s39
    %p41 = scmp.eq.s32.totalorder %s15, 0
    %p42 = por %p40, %p41
    %s44 = sadd.s32 %s43, 1
    %p47 = scmp.eq.s32.totalorder %s9, 1
    %p48 = scmp.ne.s32.totalorder %s43, %s45
    %p49 = scmp.eq.s32.totalorder %s9, 0
    %p50 = por %p48, %p49
    %p51 = scmp.ne.s32.totalorder %s43, %s45
    %p52 = scmp.eq.s32.totalorder %s14, 1
    %p53 = por %p51, %p52
    %p54 = scmp.ne.s32.totalorder %s45, %s46
    %p55 = scmp.eq.s32.totalorder %s14, 0
    %p56 = por %p54, %p55
    %p57 = scmp.ne.s32.totalorder %s45, %s46
    %p58 = scmp.eq.s32.totalorder %s15, 1
    %p59 = por %p57, %p58
    %p61 = scmp.ne.s32.totalorder %s46, %s60
    %p62 = scmp.eq.s32.totalorder %s15, 0
    %p63 = por %p61, %p62
    %s65 = sadd.s32 %s64, 1
    %p68 = scmp.eq.s32.totalorder %s9, 1
    %p69 = scmp.ne.s32.totalorder %s64, %s66
    %p70 = scmp.eq.s32.totalorder %s9, 0
    %p71 = por %p69, %p70
    %p72 = scmp.ne.s32.totalorder %s64, %s66
    %p73 = scmp.eq.s32.totalorder %s14, 1
    %p74 = por %p72, %p73
    %p75 = scmp.ne.s32.totalorder %s66, %s67
    %p76 = scmp.eq.s32.totalorder %s14, 0
    %p77 = por %p75, %p76
    %p78 = scmp.ne.s32.totalorder %s66, %s67
    %p79 = scmp.eq.s32.totalorder %s15, 1
    %p80 = por %p78, %p79
    %p82 = scmp.ne.s32.totalorder %s67, %s81
    %p83 = scmp.eq.s32.totalorder %s15, 0
    %p84 = por %p82, %p83
    %s85 = ssub.s32 %s9, %s16
    %p86 = scmp.eq.s32.totalorder %s85, 0
    %s88 = sadd.s32 %s87, 1
    %s89 = scalar_select %p86, %s87, %s88
    %p92 = pneg %p86
    %p93 = scmp.eq.s32.totalorder %s9, 1
    %p94 = por %p92, %p93
    %p95 = scmp.ne.s32.totalorder %s87, %s90
    %p96 = scmp.eq.s32.totalorder %s9, 0
    %p97 = por %p95, %p96
    %p98 = scmp.ne.s32.totalorder %s87, %s90
    %p99 = scmp.eq.s32.totalorder %s14, 1
    %p100 = por %p98, %p99
    %p101 = scmp.ne.s32.totalorder %s90, %s91
    %p102 = scmp.eq.s32.totalorder %s14, 0
    %p103 = por %p101, %p102
    %p104 = scmp.ne.s32.totalorder %s90, %s91
    %p105 = scmp.eq.s32.totalorder %s15, 1
    %p106 = por %p104, %p105
    %p108 = scmp.ne.s32.totalorder %s91, %s107
    %p109 = scmp.eq.s32.totalorder %s15, 0
    %p110 = por %p108, %p109
    %p111 = scmp.le.s32.totalorder 1, %s9
    %p112 = scmp.lt.s32.totalorder %s9, 3
    %p113 = pnand %p111, %p112
    %p114 = pneg %p113
    // Predicated region
    $region9: #{detection_loss.5} parent=5 // pred_check
      _
    $region10: #{detection_loss.5} parent=5 // pred_check_branch
      %116 = sbr.rel (%p113) target = $region12
    $region11: #{detection_loss.5} parent=5 // pred_region
      %s117 = ssub.s32 %s9, 1
      // Predicated region
      $region13: #{detection_loss.5} parent=11 // pred_check
        %p118 = pneg %p56
      $region14: #{detection_loss.5} parent=11 // pred_check_branch
        %120 = sbr.rel (%p118) target = $region16
      $region15: #{detection_loss.5} parent=11 // pred_region
        _
      $region16: #{detection_loss.5} parent=11 // pred_fallthru
        _
      // Predicated region
      $region17: #{detection_loss.5} parent=11 // pred_check
        %p121 = pneg %p77
      $region18: #{detection_loss.5} parent=11 // pred_check_branch
        %123 = sbr.rel (%p121) target = $region20
      $region19: #{detection_loss.5} parent=11 // pred_region
        _
      $region20: #{detection_loss.5} parent=11 // pred_fallthru
        _
    $region12: #{detection_loss.5} parent=5 // pred_fallthru
      _
    %p124 = scmp.lt.s32.totalorder %s9, 2
    // Predicated region
    $region21: #{detection_loss.5} parent=5 // pred_check
      %p125 = pneg %p124
    $region22: #{detection_loss.5} parent=5 // pred_check_branch
      %127 = sbr.rel (%p125) target = $region24
    $region23: #{detection_loss.5} parent=5 // pred_region
      // Predicated region
      $region25: #{detection_loss.5} parent=23 // pred_check
        %p128 = pneg %p29
      $region26: #{detection_loss.5} parent=23 // pred_check_branch
        %130 = sbr.rel (%p128) target = $region28
      $region27: #{detection_loss.5} parent=23 // pred_region
        %s131 = smul.u32 32, %s9
        %p132 = scmp.lt.s32.totalorder %s131, 63
        %s133 = scalar_select %p132, %s131, 63
        %s134 = smul.addr %s133, 2
        %s135 = smul.addr %s134, 4
        %s136 = scalar_lea.vmem %s0, %s135
        %s137 = smul.u32 32, %s9
      $region28: #{detection_loss.5} parent=23 // pred_fallthru
        _
    $region24: #{detection_loss.5} parent=5 // pred_fallthru
      _
    %p138 = scmp.le.s32.totalorder 1, %s9
    %p139 = scmp.lt.s32.totalorder %s9, 3
    %p140 = pnand %p138, %p139
    %p141 = pneg %p140
    // Predicated region
    $region29: #{detection_loss.5} parent=5 // pred_check
      _
    $region30: #{detection_loss.5} parent=5 // pred_check_branch
      %143 = sbr.rel (%p140) target = $region32
    $region31: #{detection_loss.5} parent=5 // pred_region
      %s144 = ssub.s32 %s9, 1
      %s145 = smul.u32 32, %s14
      %p146 = scmp.lt.s32.totalorder %s145, 63
      %s147 = scalar_select %p146, %s145, 63
      %s148 = smul.addr %s147, 2
      %s149 = smul.addr %s148, 4
      %s150 = scalar_lea.vmem %s0, %s149
      %p151 = pneg %p35
      %p152 = pneg %p32
      %p153 = pneg %p56
      %p154 = pneg %p53
      %p155 = pneg %p77
      %p156 = pneg %p74
      %p157 = pneg %p103
      %p158 = pneg %p100
      %s159 = smul.u32 32, %s14
      %p160 = scmp.lt.s32.totalorder %s159, 63
      %s161 = scalar_select %p160, %s159, 63
      %s162 = smul.addr %s161, 8
      %s163 = scalar_lea.vmem %s3, %s162
      %s164 = smul.u32 32, %s14
      %p165 = scmp.lt.s32.totalorder %s164, 63
      %s166 = scalar_select %p165, %s164, 63
      %s167 = smul.addr %s166, 2
      %s168 = smul.addr %s167, 4
      %s169 = scalar_lea.vmem %s0, %s168
      %s170 = smul.u32 32, %s14
      %s171 = smul.u32 32, %s14
      %p172 = scmp.lt.s32.totalorder %s171, 63
      %s173 = scalar_select %p172, %s171, 63
      %s174 = smul.addr %s173, 8
      %s175 = scalar_lea.vmem %s3, %s174
      %s176 = smul.u32 32, %s14
      %v178 = vld [vmem:[%s169] sm:$0xff]
      %v179 = vld [vmem:[%s169 + $0x8] sm:$0xff]
      %v180 = vld [vmem:[%s169 + $0x10] sm:$0xff]
      %v181 = vld [vmem:[%s169 + $0x18] sm:$0xff]
      %v182 = vld [vmem:[%s169 + $0x20] sm:$0xff]
      %v183 = vld [vmem:[%s169 + $0x28] sm:$0xff]
      %v184 = vld [vmem:[%s169 + $0x30] sm:$0xff]
      %v185 = vld [vmem:[%s169 + $0x38] sm:$0xff]
      %v186 = vld [vmem:[%s169 + $0x40] sm:$0xff]
      %v187 = vld [vmem:[%s169 + $0x48] sm:$0xff]
      %v188 = vld [vmem:[%s169 + $0x50] sm:$0xff]
      %v189 = vld [vmem:[%s169 + $0x58] sm:$0xff]
      %v190 = vld [vmem:[%s169 + $0x60] sm:$0xff]
      %v191 = vld [vmem:[%s169 + $0x68] sm:$0xff]
      %v192 = vld [vmem:[%s169 + $0x70] sm:$0xff]
      %v193 = vld [vmem:[%s169 + $0x78] sm:$0xff]
      %v194 = vld [vmem:[%s169 + $0x80] sm:$0xff]
      %v195 = vld [vmem:[%s169 + $0x88] sm:$0xff]
      %v196 = vld [vmem:[%s169 + $0x90] sm:$0xff]
      %v197 = vld [vmem:[%s169 + $0x98] sm:$0xff]
      %v198 = vld [vmem:[%s169 + $0xa0] sm:$0xff]
      %v199 = vld [vmem:[%s169 + $0xa8] sm:$0xff]
      %v200 = vld [vmem:[%s169 + $0xb0] sm:$0xff]
      %v201 = vld [vmem:[%s169 + $0xb8] sm:$0xff]
      %v202 = vld [vmem:[%s169 + $0xc0] sm:$0xff]
      %v203 = vld [vmem:[%s169 + $0xc8] sm:$0xff]
      %v204 = vld [vmem:[%s169 + $0xd0] sm:$0xff]
      %v205 = vld [vmem:[%s169 + $0xd8] sm:$0xff]
      %v206 = vld [vmem:[%s169 + $0xe0] sm:$0xff]
      %v207 = vld [vmem:[%s169 + $0xe8] sm:$0xff]
      %v208 = vld [vmem:[%s169 + $0xf0] sm:$0xff]
      %v209 = vld [vmem:[%s169 + $0xf8] sm:$0xff]
      %v210 = vld [vmem:[%s1] sm:$0xf]
      %v211 = vld [vmem:[%s1 + $0x4] sm:$0xf]
      %v212 = vld [vmem:[%s1 + $0x8] sm:$0xf]
      %v213 = vld [vmem:[%s1 + $0xc] sm:$0xf]
      %v214 = vld [vmem:[%s1 + $0x10] sm:$0xf]
      %v215 = vld [vmem:[%s1 + $0x14] sm:$0xf]
      %v216 = vld [vmem:[%s1 + $0x18] sm:$0xf]
      %v217 = vld [vmem:[%s1 + $0x1c] sm:$0xf]
      %v218 = vld [vmem:[%s1 + $0x20] sm:$0xf]
      %v219 = vld [vmem:[%s1 + $0x24] sm:$0xf]
      %v220 = vld [vmem:[%s1 + $0x28] sm:$0xf]
      %v221 = vld [vmem:[%s1 + $0x2c] sm:$0xf]
      %v222 = vld [vmem:[%s1 + $0x30] sm:$0xf]
      %v223 = vld [vmem:[%s1 + $0x34] sm:$0xf]
      %v224 = vld [vmem:[%s1 + $0x38] sm:$0xf]
      %v225 = vld [vmem:[%s1 + $0x3c] sm:$0xf]
      %v226 = vld [vmem:[%s1 + $0x40] sm:$0xf]
      %v227 = vld [vmem:[%s1 + $0x44] sm:$0xf]
      %v228 = vld [vmem:[%s2] sm:$0x1]
      %v230 = vperm.slane %v228, 0
      %v264 = vunpack.c.l.b16 %v178
      %v265 = vunpack.c.h.b16 %v178
      %v266 = vunpack.c.l.b16 %v179
      %v267 = vunpack.c.h.b16 %v179
      %v268 = vunpack.c.l.b16 %v180
      %v269 = vunpack.c.h.b16 %v180
      %v270 = vunpack.c.l.b16 %v181
      %v271 = vunpack.c.h.b16 %v181
      %v272 = vunpack.c.l.b16 %v182
      %v273 = vunpack.c.h.b16 %v182
      %v274 = vunpack.c.l.b16 %v183
      %v275 = vunpack.c.h.b16 %v183
      %v276 = vunpack.c.l.b16 %v184
      %v277 = vunpack.c.h.b16 %v184
      %v278 = vunpack.c.l.b16 %v185
      %v279 = vunpack.c.h.b16 %v185
      %v280 = vunpack.c.l.b16 %v186
      %v281 = vunpack.c.h.b16 %v186
      %v282 = vunpack.c.l.b16 %v187
      %v283 = vunpack.c.h.b16 %v187
      %v284 = vunpack.c.l.b16 %v188
      %v285 = vunpack.c.h.b16 %v188
      %v286 = vunpack.c.l.b16 %v189
      %v287 = vunpack.c.h.b16 %v189
      %v288 = vunpack.c.l.b16 %v190
      %v289 = vunpack.c.h.b16 %v190
      %v290 = vunpack.c.l.b16 %v191
      %v291 = vunpack.c.h.b16 %v191
      %v292 = vunpack.c.l.b16 %v192
      %v293 = vunpack.c.h.b16 %v192
      %v294 = vunpack.c.l.b16 %v193
      %v295 = vunpack.c.h.b16 %v193
      %v296 = vunpack.c.l.b16 %v194
      %v297 = vunpack.c.h.b16 %v194
      %v298 = vunpack.c.l.b16 %v195
      %v299 = vunpack.c.h.b16 %v195
      %v300 = vunpack.c.l.b16 %v196
      %v301 = vunpack.c.h.b16 %v196
      %v302 = vunpack.c.l.b16 %v197
      %v303 = vunpack.c.h.b16 %v197
      %v304 = vunpack.c.l.b16 %v198
      %v305 = vunpack.c.h.b16 %v198
      %v306 = vunpack.c.l.b16 %v199
      %v307 = vunpack.c.h.b16 %v199
      %v308 = vunpack.c.l.b16 %v200
      %v309 = vunpack.c.h.b16 %v200
      %v310 = vunpack.c.l.b16 %v201
      %v311 = vunpack.c.h.b16 %v201
      %v312 = vunpack.c.l.b16 %v202
      %v313 = vunpack.c.h.b16 %v202
      %v314 = vunpack.c.l.b16 %v203
      %v315 = vunpack.c.h.b16 %v203
      %v316 = vunpack.c.l.b16 %v204
      %v317 = vunpack.c.h.b16 %v204
      %v318 = vunpack.c.l.b16 %v205
      %v319 = vunpack.c.h.b16 %v205
      %v320 = vunpack.c.l.b16 %v206
      %v321 = vunpack.c.h.b16 %v206
      %v322 = vunpack.c.l.b16 %v207
      %v323 = vunpack.c.h.b16 %v207
      %v324 = vunpack.c.l.b16 %v208
      %v325 = vunpack.c.h.b16 %v208
      %v326 = vunpack.c.l.b16 %v209
      %v327 = vunpack.c.h.b16 %v209
      %v328 = vpack.c.b16 %v266, %v264
      %v329 = vpack.c.b16 %v267, %v265
      %v330 = vpack.c.b16 %v270, %v268
      %v331 = vpack.c.b16 %v271, %v269
      %v332 = vpack.c.b16 %v274, %v272
      %v333 = vpack.c.b16 %v275, %v273
      %v334 = vpack.c.b16 %v278, %v276
      %v335 = vpack.c.b16 %v279, %v277
      %v336 = vpack.c.b16 %v282, %v280
      %v337 = vpack.c.b16 %v283, %v281
      %v338 = vpack.c.b16 %v286, %v284
      %v339 = vpack.c.b16 %v287, %v285
      %v340 = vpack.c.b16 %v290, %v288
      %v341 = vpack.c.b16 %v291, %v289
      %v342 = vpack.c.b16 %v294, %v292
      %v343 = vpack.c.b16 %v295, %v293
      %v344 = vpack.c.b16 %v298, %v296
      %v345 = vpack.c.b16 %v299, %v297
      %v346 = vpack.c.b16 %v302, %v300
      %v347 = vpack.c.b16 %v303, %v301
      %v348 = vpack.c.b16 %v306, %v304
      %v349 = vpack.c.b16 %v307, %v305
      %v350 = vpack.c.b16 %v310, %v308
      %v351 = vpack.c.b16 %v311, %v309
      %v352 = vpack.c.b16 %v314, %v312
      %v353 = vpack.c.b16 %v315, %v313
      %v354 = vpack.c.b16 %v318, %v316
      %v355 = vpack.c.b16 %v319, %v317
      %v356 = vpack.c.b16 %v322, %v320
      %v357 = vpack.c.b16 %v323, %v321
      %v358 = vpack.c.b16 %v326, %v324
      %v359 = vpack.c.b16 %v327, %v325
      %v394 = vunpack.c.l.b16 %v210
      %v395 = vunpack.c.l.b16 %v211
      %v396 = vunpack.c.l.b16 %v212
      %v397 = vunpack.c.l.b16 %v213
      %v398 = vunpack.c.l.b16 %v214
      %v399 = vunpack.c.l.b16 %v215
      %v400 = vunpack.c.l.b16 %v216
      %v401 = vunpack.c.l.b16 %v217
      %v402 = vunpack.c.l.b16 %v218
      %v403 = vunpack.c.l.b16 %v219
      %v404 = vunpack.c.l.b16 %v220
      %v405 = vunpack.c.l.b16 %v221
      %v406 = vunpack.c.l.b16 %v222
      %v407 = vunpack.c.l.b16 %v223
      %v408 = vunpack.c.l.b16 %v224
      %v409 = vunpack.c.l.b16 %v225
      %v410 = vunpack.c.l.b16 %v226
      %v411 = vunpack.c.l.b16 %v227
      %v412 = vpack.c.b16 %v395, %v394
      %v413 = vpack.c.b16 %v397, %v396
      %v414 = vpack.c.b16 %v399, %v398
      %v415 = vpack.c.b16 %v401, %v400
      %v416 = vpack.c.b16 %v403, %v402
      %v417 = vpack.c.b16 %v405, %v404
      %v418 = vpack.c.b16 %v407, %v406
      %v419 = vpack.c.b16 %v409, %v408
      %v420 = vpack.c.b16 %v411, %v410
      %vm430 = vcmask 130048
      %v432 = vsel %vm430, %v329, 0
      %v435 = vsel %vm430, %v331, 0
      %v438 = vsel %vm430, %v333, 0
      %v441 = vsel %vm430, %v335, 0
      %v444 = vsel %vm430, %v337, 0
      %v447 = vsel %vm430, %v339, 0
      %v450 = vsel %vm430, %v341, 0
      %v453 = vsel %vm430, %v343, 0
      %v456 = vsel %vm430, %v345, 0
      %v459 = vsel %vm430, %v347, 0
      %v462 = vsel %vm430, %v349, 0
      %v465 = vsel %vm430, %v351, 0
      %v468 = vsel %vm430, %v353, 0
      %v471 = vsel %vm430, %v355, 0
      %v474 = vsel %vm430, %v357, 0
      %v477 = vsel %vm430, %v359, 0
      %479 = vmatpush.bf16.msra.mxu0 %v419
      %480 = vmatpush.bf16.msra.mxu0 %v418
      %481 = vmatpush.bf16.msra.mxu0 %v417
      %482 = vmatpush.bf16.msra.mxu0 %v416
      %483 = vmatpush.bf16.msra.mxu0 %v415
      %484 = vmatpush.bf16.msra.mxu0 %v414
      %485 = vmatpush.bf16.msra.mxu0 %v413
      %486 = vmatpush.bf16.msra.mxu0 %v412
      %487 = vmatmul.bf16.gmra.mxu0 %v328
      %v488 = vpop.f32.mrf.mxu0
      %v489 = vadd.f32 %v230, %v488
      %v490 = vpop.f32.mrf.mxu0
      %v491 = vadd.f32 %v230, %v490
      %492 = vmatmul.bf16.gmra.mxu0 %v330
      %v493 = vpop.f32.mrf.mxu0
      %v494 = vadd.f32 %v230, %v493
      %v495 = vpop.f32.mrf.mxu0
      %v496 = vadd.f32 %v230, %v495
      %497 = vmatmul.bf16.gmra.mxu0 %v332
      %v498 = vpop.f32.mrf.mxu0
      %v499 = vadd.f32 %v230, %v498
      %v500 = vpop.f32.mrf.mxu0
      %v501 = vadd.f32 %v230, %v500
      %502 = vmatmul.bf16.gmra.mxu0 %v334
      %v503 = vpop.f32.mrf.mxu0
      %v504 = vadd.f32 %v230, %v503
      %v505 = vpop.f32.mrf.mxu0
      %v506 = vadd.f32 %v230, %v505
      %507 = vmatmul.bf16.gmra.mxu0 %v336
      %v508 = vpop.f32.mrf.mxu0
      %v509 = vadd.f32 %v230, %v508
      %v510 = vpop.f32.mrf.mxu0
      %v511 = vadd.f32 %v230, %v510
      %512 = vmatmul.bf16.gmra.mxu0 %v338
      %v513 = vpop.f32.mrf.mxu0
      %v514 = vadd.f32 %v230, %v513
      %v515 = vpop.f32.mrf.mxu0
      %v516 = vadd.f32 %v230, %v515
      %517 = vmatmul.bf16.gmra.mxu0 %v340
      %v518 = vpop.f32.mrf.mxu0
      %v519 = vadd.f32 %v230, %v518
      %v520 = vpop.f32.mrf.mxu0
      %v521 = vadd.f32 %v230, %v520
      %522 = vmatmul.bf16.gmra.mxu0 %v342
      %v523 = vpop.f32.mrf.mxu0
      %v524 = vadd.f32 %v230, %v523
      %v525 = vpop.f32.mrf.mxu0
      %v526 = vadd.f32 %v230, %v525
      %527 = vmatmul.bf16.gmra.mxu0 %v344
      %v528 = vpop.f32.mrf.mxu0
      %v529 = vadd.f32 %v230, %v528
      %v530 = vpop.f32.mrf.mxu0
      %v531 = vadd.f32 %v230, %v530
      %532 = vmatmul.bf16.gmra.mxu0 %v346
      %v533 = vpop.f32.mrf.mxu0
      %v534 = vadd.f32 %v230, %v533
      %v535 = vpop.f32.mrf.mxu0
      %v536 = vadd.f32 %v230, %v535
      %537 = vmatmul.bf16.gmra.mxu0 %v348
      %v538 = vpop.f32.mrf.mxu0
      %v539 = vadd.f32 %v230, %v538
      %v540 = vpop.f32.mrf.mxu0
      %v541 = vadd.f32 %v230, %v540
      %542 = vmatmul.bf16.gmra.mxu0 %v350
      %v543 = vpop.f32.mrf.mxu0
      %v544 = vadd.f32 %v230, %v543
      %v545 = vpop.f32.mrf.mxu0
      %v546 = vadd.f32 %v230, %v545
      %547 = vmatmul.bf16.gmra.mxu0 %v352
      %v548 = vpop.f32.mrf.mxu0
      %v549 = vadd.f32 %v230, %v548
      %v550 = vpop.f32.mrf.mxu0
      %v551 = vadd.f32 %v230, %v550
      %552 = vmatmul.bf16.gmra.mxu0 %v354
      %v553 = vpop.f32.mrf.mxu0
      %v554 = vadd.f32 %v230, %v553
      %v555 = vpop.f32.mrf.mxu0
      %v556 = vadd.f32 %v230, %v555
      %557 = vmatmul.bf16.gmra.mxu0 %v356
      %v558 = vpop.f32.mrf.mxu0
      %v559 = vadd.f32 %v230, %v558
      %v560 = vpop.f32.mrf.mxu0
      %v561 = vadd.f32 %v230, %v560
      %562 = vmatmul.bf16.gmra.mxu0 %v358
      %v563 = vpop.f32.mrf.mxu0
      %v564 = vadd.f32 %v230, %v563
      %v565 = vpop.f32.mrf.mxu0
      %v566 = vadd.f32 %v230, %v565
      %567 = vdwg.mxu0
      %568 = vmatpush.bf16.msra.mxu0 0
      %569 = vmatpush.bf16.msra.mxu0 0
      %570 = vmatpush.bf16.msra.mxu0 0
      %571 = vmatpush.bf16.msra.mxu0 0
      %572 = vmatpush.bf16.msra.mxu0 0
      %573 = vmatpush.bf16.msra.mxu0 0
      %574 = vmatpush.bf16.msra.mxu0 0
      %575 = vmatpush.bf16.msra.mxu0 %v420
      %576 = vmatmul.bf16.gmra.mxu0 %v432
      %v577 = vpop.f32.mrf.mxu0
      %v578 = vadd.f32 %v489, %v577
      %v579 = vpop.f32.mrf.mxu0
      %v580 = vadd.f32 %v491, %v579
      %581 = vmatmul.bf16.gmra.mxu0 %v435
      %v582 = vpop.f32.mrf.mxu0
      %v583 = vadd.f32 %v494, %v582
      %v584 = vpop.f32.mrf.mxu0
      %v585 = vadd.f32 %v496, %v584
      %586 = vmatmul.bf16.gmra.mxu0 %v438
      %v587 = vpop.f32.mrf.mxu0
      %v588 = vadd.f32 %v499, %v587
      %v589 = vpop.f32.mrf.mxu0
      %v590 = vadd.f32 %v501, %v589
      %591 = vmatmul.bf16.gmra.mxu0 %v441
      %v592 = vpop.f32.mrf.mxu0
      %v593 = vadd.f32 %v504, %v592
      %v594 = vpop.f32.mrf.mxu0
      %v595 = vadd.f32 %v506, %v594
      %596 = vmatmul.bf16.gmra.mxu0 %v444
      %v597 = vpop.f32.mrf.mxu0
      %v598 = vadd.f32 %v509, %v597
      %v599 = vpop.f32.mrf.mxu0
      %v600 = vadd.f32 %v511, %v599
      %601 = vmatmul.bf16.gmra.mxu0 %v447
      %v602 = vpop.f32.mrf.mxu0
      %v603 = vadd.f32 %v514, %v602
      %v604 = vpop.f32.mrf.mxu0
      %v605 = vadd.f32 %v516, %v604
      %606 = vmatmul.bf16.gmra.mxu0 %v450
      %v607 = vpop.f32.mrf.mxu0
      %v608 = vadd.f32 %v519, %v607
      %v609 = vpop.f32.mrf.mxu0
      %v610 = vadd.f32 %v521, %v609
      %611 = vmatmul.bf16.gmra.mxu0 %v453
      %v612 = vpop.f32.mrf.mxu0
      %v613 = vadd.f32 %v524, %v612
      %v614 = vpop.f32.mrf.mxu0
      %v615 = vadd.f32 %v526, %v614
      %616 = vmatmul.bf16.gmra.mxu0 %v456
      %v617 = vpop.f32.mrf.mxu0
      %v618 = vadd.f32 %v529, %v617
      %v619 = vpop.f32.mrf.mxu0
      %v620 = vadd.f32 %v531, %v619
      %621 = vmatmul.bf16.gmra.mxu0 %v459
      %v622 = vpop.f32.mrf.mxu0
      %v623 = vadd.f32 %v534, %v622
      %v624 = vpop.f32.mrf.mxu0
      %v625 = vadd.f32 %v536, %v624
      %626 = vmatmul.bf16.gmra.mxu0 %v462
      %v627 = vpop.f32.mrf.mxu0
      %v628 = vadd.f32 %v539, %v627
      %v629 = vpop.f32.mrf.mxu0
      %v630 = vadd.f32 %v541, %v629
      %631 = vmatmul.bf16.gmra.mxu0 %v465
      %v632 = vpop.f32.mrf.mxu0
      %v633 = vadd.f32 %v544, %v632
      %v634 = vpop.f32.mrf.mxu0
      %v635 = vadd.f32 %v546, %v634
      %636 = vmatmul.bf16.gmra.mxu0 %v468
      %v637 = vpop.f32.mrf.mxu0
      %v638 = vadd.f32 %v549, %v637
      %v639 = vpop.f32.mrf.mxu0
      %v640 = vadd.f32 %v551, %v639
      %641 = vmatmul.bf16.gmra.mxu0 %v471
      %v642 = vpop.f32.mrf.mxu0
      %v643 = vadd.f32 %v554, %v642
      %v644 = vpop.f32.mrf.mxu0
      %v645 = vadd.f32 %v556, %v644
      %646 = vmatmul.bf16.gmra.mxu0 %v474
      %v647 = vpop.f32.mrf.mxu0
      %v648 = vadd.f32 %v559, %v647
      %v649 = vpop.f32.mrf.mxu0
      %v650 = vadd.f32 %v561, %v649
      %651 = vmatmul.bf16.gmra.mxu0 %v477
      %v652 = vpop.f32.mrf.mxu0
      %v653 = vadd.f32 %v564, %v652
      %v654 = vpop.f32.mrf.mxu0
      %v655 = vadd.f32 %v566, %v654
      %656 = vdwg.mxu0
      %v657 = vmax.f32 %v578, 0.0
      %v658 = vmax.f32 %v580, 0.0
      %v659 = vmax.f32 %v583, 0.0
      %v660 = vmax.f32 %v585, 0.0
      %v661 = vmax.f32 %v588, 0.0
      %v662 = vmax.f32 %v590, 0.0
      %v663 = vmax.f32 %v593, 0.0
      %v664 = vmax.f32 %v595, 0.0
      %v665 = vmax.f32 %v598, 0.0
      %v666 = vmax.f32 %v600, 0.0
      %v667 = vmax.f32 %v603, 0.0
      %v668 = vmax.f32 %v605, 0.0
      %v669 = vmax.f32 %v608, 0.0
      %v670 = vmax.f32 %v610, 0.0
      %v671 = vmax.f32 %v613, 0.0
      %v672 = vmax.f32 %v615, 0.0
      %v673 = vmax.f32 %v618, 0.0
      %v674 = vmax.f32 %v620, 0.0
      %v675 = vmax.f32 %v623, 0.0
      %v676 = vmax.f32 %v625, 0.0
      %v677 = vmax.f32 %v628, 0.0
      %v678 = vmax.f32 %v630, 0.0
      %v679 = vmax.f32 %v633, 0.0
      %v680 = vmax.f32 %v635, 0.0
      %v681 = vmax.f32 %v638, 0.0
      %v682 = vmax.f32 %v640, 0.0
      %v683 = vmax.f32 %v643, 0.0
      %v684 = vmax.f32 %v645, 0.0
      %v685 = vmax.f32 %v648, 0.0
      %v686 = vmax.f32 %v650, 0.0
      %v687 = vmax.f32 %v653, 0.0
      %v688 = vmax.f32 %v655, 0.0
      %vm689 = vcmask 261120
      %690 = vst.msk [vmem:[%s175] sm:$0xff] %vm689, %v657
      %691 = vst.msk [vmem:[%s175 + $0x8] sm:$0xff] %vm689, %v658
      %692 = vst.msk [vmem:[%s175 + $0x10] sm:$0xff] %vm689, %v659
      %693 = vst.msk [vmem:[%s175 + $0x18] sm:$0xff] %vm689, %v660
      %694 = vst.msk [vmem:[%s175 + $0x20] sm:$0xff] %vm689, %v661
      %695 = vst.msk [vmem:[%s175 + $0x28] sm:$0xff] %vm689, %v662
      %696 = vst.msk [vmem:[%s175 + $0x30] sm:$0xff] %vm689, %v663
      %697 = vst.msk [vmem:[%s175 + $0x38] sm:$0xff] %vm689, %v664
      %698 = vst.msk [vmem:[%s175 + $0x40] sm:$0xff] %vm689, %v665
      %699 = vst.msk [vmem:[%s175 + $0x48] sm:$0xff] %vm689, %v666
      %700 = vst.msk [vmem:[%s175 + $0x50] sm:$0xff] %vm689, %v667
      %701 = vst.msk [vmem:[%s175 + $0x58] sm:$0xff] %vm689, %v668
      %702 = vst.msk [vmem:[%s175 + $0x60] sm:$0xff] %vm689, %v669
      %703 = vst.msk [vmem:[%s175 + $0x68] sm:$0xff] %vm689, %v670
      %704 = vst.msk [vmem:[%s175 + $0x70] sm:$0xff] %vm689, %v671
      %705 = vst.msk [vmem:[%s175 + $0x78] sm:$0xff] %vm689, %v672
      %706 = vst.msk [vmem:[%s175 + $0x80] sm:$0xff] %vm689, %v673
      %707 = vst.msk [vmem:[%s175 + $0x88] sm:$0xff] %vm689, %v674
      %708 = vst.msk [vmem:[%s175 + $0x90] sm:$0xff] %vm689, %v675
      %709 = vst.msk [vmem:[%s175 + $0x98] sm:$0xff] %vm689, %v676
      %710 = vst.msk [vmem:[%s175 + $0xa0] sm:$0xff] %vm689, %v677
      %711 = vst.msk [vmem:[%s175 + $0xa8] sm:$0xff] %vm689, %v678
      %712 = vst.msk [vmem:[%s175 + $0xb0] sm:$0xff] %vm689, %v679
      %713 = vst.msk [vmem:[%s175 + $0xb8] sm:$0xff] %vm689, %v680
      %714 = vst.msk [vmem:[%s175 + $0xc0] sm:$0xff] %vm689, %v681
      %715 = vst.msk [vmem:[%s175 + $0xc8] sm:$0xff] %vm689, %v682
      %716 = vst.msk [vmem:[%s175 + $0xd0] sm:$0xff] %vm689, %v683
      %717 = vst.msk [vmem:[%s175 + $0xd8] sm:$0xff] %vm689, %v684
      %718 = vst.msk [vmem:[%s175 + $0xe0] sm:$0xff] %vm689, %v685
      %719 = vst.msk [vmem:[%s175 + $0xe8] sm:$0xff] %vm689, %v686
      %720 = vst.msk [vmem:[%s175 + $0xf0] sm:$0xff] %vm689, %v687
      %721 = vst.msk [vmem:[%s175 + $0xf8] sm:$0xff] %vm689, %v688
      %s722 = smul.u32 32, %s14
      %p723 = scmp.lt.s32.totalorder %s722, 63
      %s724 = scalar_select %p723, %s722, 63
      %s725 = smul.addr %s724, 8
      %s726 = scalar_lea.vmem %s3, %s725
      // Predicated region
      $region33: #{detection_loss.5} parent=31 // pred_check
        %p727 = pneg %p100
      $region34: #{detection_loss.5} parent=31 // pred_check_branch
        %729 = sbr.rel (%p727) target = $region36
      $region35: #{detection_loss.5} parent=31 // pred_region
        %s730 = smul.u32 32, %s14
      $region36: #{detection_loss.5} parent=31 // pred_fallthru
        _
    $region32: #{detection_loss.5} parent=5 // pred_fallthru
      _
    %p731 = scmp.le.s32.totalorder 2, %s9
    // Predicated region
    $region37: #{detection_loss.5} parent=5 // pred_check
      %p732 = pneg %p731
    $region38: #{detection_loss.5} parent=5 // pred_check_branch
      %734 = sbr.rel (%p732) target = $region40
    $region39: #{detection_loss.5} parent=5 // pred_region
      %s735 = ssub.s32 %s9, 2
      // Predicated region
      $region41: #{detection_loss.5} parent=39 // pred_check
        %p736 = pneg %p106
      $region42: #{detection_loss.5} parent=39 // pred_check_branch
        %738 = sbr.rel (%p736) target = $region44
      $region43: #{detection_loss.5} parent=39 // pred_region
        %s739 = smul.u32 32, %s15
        %p740 = scmp.lt.s32.totalorder %s739, 63
        %s741 = scalar_select %p740, %s739, 63
        %s742 = smul.addr %s741, 8
        %s743 = scalar_lea.vmem %s3, %s742
      $region44: #{detection_loss.5} parent=39 // pred_fallthru
        _
    $region40: #{detection_loss.5} parent=5 // pred_fallthru
      _
  $region6: #{detection_loss.5} parent=0 // loop_footer
    %s13 = sadd.s32 1, %s9
  $region7: #{detection_loss.5} parent=0 // loop_footer_branch
    %8 = sbr.rel target = $region3
  $region8: #{detection_loss.5} parent=0 // loop_exit
    _

// kernel: detection_loss.6
$region0: #{detection_loss.6}
  #allocation0 [shape = 'u32[]', space=smem, size = 0x4, offset = 0x4, fixed_abs, tag = 'smem constant byte address 0x4 - core index']
  #allocation1 [shape = 'u32[72,128]{1,0:T(1,128)}', space=vmem, size = 0x9000, scoped, tag = 'internal scratch']
  %s0 = inlined_call_operand.vmem [shape: bf16[768,50], index: 0, kind: input, shape index: {}]
  %s1 = inlined_call_operand.vmem [shape: bf16[50,6], index: 1, kind: input, shape index: {}]
  %s2 = inlined_call_operand.vmem [shape: f32[1,6], index: 2, kind: input, shape index: {}]
  %s3 = inlined_call_operand.vmem [shape: f32[768,6], index: 3, kind: output, shape index: {}]
  %s4 = sld [smem:[#allocation0]]
  $region45: #{detection_loss.6} parent=0
    _
  %s6 = ssub.s32 1, %s4
  %s7 = scalar_select 0, %s6, %s4
  loop: start=0, step=1, limit=5
  $region2: #{detection_loss.6} parent=0 // loop_pre_header
    _
  $region3: #{detection_loss.6} parent=0 // loop_header
    %s9 = sphi 0, %s13
    %p10 = scmp.ge.s32.totalorder %s9, 5
    %s19 = sphi 0, %s21
    %s22 = sphi 0, %s19
    %s23 = sphi 0, %s22
    %s39 = sphi 0, %s23
    %s43 = sphi 0, %s43
    %s45 = sphi 0, %s43
    %s46 = sphi 0, %s45
    %s60 = sphi 0, %s46
    %s64 = sphi 0, %s64
    %s66 = sphi 0, %s64
    %s67 = sphi 0, %s66
    %s81 = sphi 0, %s67
    %s87 = sphi 0, %s89
    %s90 = sphi 0, %s87
    %s91 = sphi 0, %s90
    %s107 = sphi 0, %s91
  $region4: #{detection_loss.6} parent=0 // loop_header_branch
    %12 = sbr.rel (%p10) target = $region8
  $region5: #{detection_loss.6} parent=0 // loop_body
    %s14 = ssub.s32 %s9, 1
    %s15 = ssub.s32 %s9, 2
    %s16 = sadd.s32 %s9, 1
    %s17 = ssub.s32 %s9, %s16
    %p18 = scmp.eq.s32.totalorder %s17, 0
    %s20 = sadd.s32 %s19, 1
    %s21 = scalar_select %p18, %s19, %s20
    %p24 = pneg %p18
    %p25 = scmp.eq.s32.totalorder %s9, 2
    %p26 = por %p24, %p25
    %p27 = scmp.ne.s32.totalorder %s19, %s22
    %p28 = scmp.eq.s32.totalorder %s9, 0
    %p29 = por %p27, %p28
    %p30 = scmp.ne.s32.totalorder %s19, %s22
    %p31 = scmp.eq.s32.totalorder %s14, 2
    %p32 = por %p30, %p31
    %p33 = scmp.ne.s32.totalorder %s22, %s23
    %p34 = scmp.eq.s32.totalorder %s14, 0
    %p35 = por %p33, %p34
    %p36 = scmp.ne.s32.totalorder %s22, %s23
    %p37 = scmp.eq.s32.totalorder %s15, 2
    %p38 = por %p36, %p37
    %p40 = scmp.ne.s32.totalorder %s23, %s39
    %p41 = scmp.eq.s32.totalorder %s15, 0
    %p42 = por %p40, %p41
    %s44 = sadd.s32 %s43, 1
    %p47 = scmp.eq.s32.totalorder %s9, 2
    %p48 = scmp.ne.s32.totalorder %s43, %s45
    %p49 = scmp.eq.s32.totalorder %s9, 0
    %p50 = por %p48, %p49
    %p51 = scmp.ne.s32.totalorder %s43, %s45
    %p52 = scmp.eq.s32.totalorder %s14, 2
    %p53 = por %p51, %p52
    %p54 = scmp.ne.s32.totalorder %s45, %s46
    %p55 = scmp.eq.s32.totalorder %s14, 0
    %p56 = por %p54, %p55
    %p57 = scmp.ne.s32.totalorder %s45, %s46
    %p58 = scmp.eq.s32.totalorder %s15, 2
    %p59 = por %p57, %p58
    %p61 = scmp.ne.s32.totalorder %s46, %s60
    %p62 = scmp.eq.s32.totalorder %s15, 0
    %p63 = por %p61, %p62
    %s65 = sadd.s32 %s64, 1
    %p68 = scmp.eq.s32.totalorder %s9, 2
    %p69 = scmp.ne.s32.totalorder %s64, %s66
    %p70 = scmp.eq.s32.totalorder %s9, 0
    %p71 = por %p69, %p70
    %p72 = scmp.ne.s32.totalorder %s64, %s66
    %p73 = scmp.eq.s32.totalorder %s14, 2
    %p74 = por %p72, %p73
    %p75 = scmp.ne.s32.totalorder %s66, %s67
    %p76 = scmp.eq.s32.totalorder %s14, 0
    %p77 = por %p75, %p76
    %p78 = scmp.ne.s32.totalorder %s66, %s67
    %p79 = scmp.eq.s32.totalorder %s15, 2
    %p80 = por %p78, %p79
    %p82 = scmp.ne.s32.totalorder %s67, %s81
    %p83 = scmp.eq.s32.totalorder %s15, 0
    %p84 = por %p82, %p83
    %s85 = ssub.s32 %s9, %s16
    %p86 = scmp.eq.s32.totalorder %s85, 0
    %s88 = sadd.s32 %s87, 1
    %s89 = scalar_select %p86, %s87, %s88
    %p92 = pneg %p86
    %p93 = scmp.eq.s32.totalorder %s9, 2
    %p94 = por %p92, %p93
    %p95 = scmp.ne.s32.totalorder %s87, %s90
    %p96 = scmp.eq.s32.totalorder %s9, 0
    %p97 = por %p95, %p96
    %p98 = scmp.ne.s32.totalorder %s87, %s90
    %p99 = scmp.eq.s32.totalorder %s14, 2
    %p100 = por %p98, %p99
    %p101 = scmp.ne.s32.totalorder %s90, %s91
    %p102 = scmp.eq.s32.totalorder %s14, 0
    %p103 = por %p101, %p102
    %p104 = scmp.ne.s32.totalorder %s90, %s91
    %p105 = scmp.eq.s32.totalorder %s15, 2
    %p106 = por %p104, %p105
    %p108 = scmp.ne.s32.totalorder %s91, %s107
    %p109 = scmp.eq.s32.totalorder %s15, 0
    %p110 = por %p108, %p109
    %p111 = scmp.le.s32.totalorder 1, %s9
    %p112 = scmp.lt.s32.totalorder %s9, 4
    %p113 = pnand %p111, %p112
    %p114 = pneg %p113
    // Predicated region
    $region9: #{detection_loss.6} parent=5 // pred_check
      _
    $region10: #{detection_loss.6} parent=5 // pred_check_branch
      %116 = sbr.rel (%p113) target = $region12
    $region11: #{detection_loss.6} parent=5 // pred_region
      %s117 = ssub.s32 %s9, 1
      // Predicated region
      $region13: #{detection_loss.6} parent=11 // pred_check
        %p118 = pneg %p56
      $region14: #{detection_loss.6} parent=11 // pred_check_branch
        %120 = sbr.rel (%p118) target = $region16
      $region15: #{detection_loss.6} parent=11 // pred_region
        _
      $region16: #{detection_loss.6} parent=11 // pred_fallthru
        _
      // Predicated region
      $region17: #{detection_loss.6} parent=11 // pred_check
        %p121 = pneg %p77
      $region18: #{detection_loss.6} parent=11 // pred_check_branch
        %123 = sbr.rel (%p121) target = $region20
      $region19: #{detection_loss.6} parent=11 // pred_region
        _
      $region20: #{detection_loss.6} parent=11 // pred_fallthru
        _
    $region12: #{detection_loss.6} parent=5 // pred_fallthru
      _
    %p124 = scmp.lt.s32.totalorder %s9, 3
    // Predicated region
    $region21: #{detection_loss.6} parent=5 // pred_check
      %p125 = pneg %p124
    $region22: #{detection_loss.6} parent=5 // pred_check_branch
      %127 = sbr.rel (%p125) target = $region24
    $region23: #{detection_loss.6} parent=5 // pred_region
      // Predicated region
      $region25: #{detection_loss.6} parent=23 // pred_check
        %p128 = pneg %p29
      $region26: #{detection_loss.6} parent=23 // pred_check_branch
        %130 = sbr.rel (%p128) target = $region28
      $region27: #{detection_loss.6} parent=23 // pred_region
        %s131 = smul.u32 32, %s9
        %p132 = scmp.lt.s32.totalorder %s131, 95
        %s133 = scalar_select %p132, %s131, 95
        %s134 = smul.addr %s133, 4
        %s135 = scalar_lea.vmem %s0, %s134
        %s136 = smul.u32 32, %s9
      $region28: #{detection_loss.6} parent=23 // pred_fallthru
        _
    $region24: #{detection_loss.6} parent=5 // pred_fallthru
      _
    %p137 = scmp.le.s32.totalorder 1, %s9
    %p138 = scmp.lt.s32.totalorder %s9, 4
    %p139 = pnand %p137, %p138
    %p140 = pneg %p139
    // Predicated region
    $region29: #{detection_loss.6} parent=5 // pred_check
      _
    $region30: #{detection_loss.6} parent=5 // pred_check_branch
      %142 = sbr.rel (%p139) target = $region32
    $region31: #{detection_loss.6} parent=5 // pred_region
      %s143 = ssub.s32 %s9, 1
      %s144 = smul.u32 32, %s14
      %p145 = scmp.lt.s32.totalorder %s144, 95
      %s146 = scalar_select %p145, %s144, 95
      %s147 = smul.addr %s146, 4
      %s148 = scalar_lea.vmem %s0, %s147
      %p149 = pneg %p35
      %p150 = pneg %p32
      %p151 = pneg %p56
      %p152 = pneg %p53
      %p153 = pneg %p77
      %p154 = pneg %p74
      %p155 = pneg %p103
      %p156 = pneg %p100
      %s157 = smul.u32 32, %s14
      %p158 = scmp.lt.s32.totalorder %s157, 95
      %s159 = scalar_select %p158, %s157, 95
      %s160 = smul.addr %s159, 8
      %s161 = scalar_lea.vmem %s3, %s160
      %s162 = smul.u32 32, %s14
      %p163 = scmp.lt.s32.totalorder %s162, 95
      %s164 = scalar_select %p163, %s162, 95
      %s165 = smul.addr %s164, 4
      %s166 = scalar_lea.vmem %s0, %s165
      %s167 = smul.u32 32, %s14
      %s168 = smul.u32 32, %s14
      %p169 = scmp.lt.s32.totalorder %s168, 95
      %s170 = scalar_select %p169, %s168, 95
      %s171 = smul.addr %s170, 8
      %s172 = scalar_lea.vmem %s3, %s171
      %s173 = smul.u32 32, %s14
      %v175 = vld [vmem:[%s166] sm:$0xf]
      %v176 = vld [vmem:[%s166 + $0x4] sm:$0xf]
      %v177 = vld [vmem:[%s166 + $0x8] sm:$0xf]
      %v178 = vld [vmem:[%s166 + $0xc] sm:$0xf]
      %v179 = vld [vmem:[%s166 + $0x10] sm:$0xf]
      %v180 = vld [vmem:[%s166 + $0x14] sm:$0xf]
      %v181 = vld [vmem:[%s166 + $0x18] sm:$0xf]
      %v182 = vld [vmem:[%s166 + $0x1c] sm:$0xf]
      %v183 = vld [vmem:[%s166 + $0x20] sm:$0xf]
      %v184 = vld [vmem:[%s166 + $0x24] sm:$0xf]
      %v185 = vld [vmem:[%s166 + $0x28] sm:$0xf]
      %v186 = vld [vmem:[%s166 + $0x2c] sm:$0xf]
      %v187 = vld [vmem:[%s166 + $0x30] sm:$0xf]
      %v188 = vld [vmem:[%s166 + $0x34] sm:$0xf]
      %v189 = vld [vmem:[%s166 + $0x38] sm:$0xf]
      %v190 = vld [vmem:[%s166 + $0x3c] sm:$0xf]
      %v191 = vld [vmem:[%s166 + $0x40] sm:$0xf]
      %v192 = vld [vmem:[%s166 + $0x44] sm:$0xf]
      %v193 = vld [vmem:[%s166 + $0x48] sm:$0xf]
      %v194 = vld [vmem:[%s166 + $0x4c] sm:$0xf]
      %v195 = vld [vmem:[%s166 + $0x50] sm:$0xf]
      %v196 = vld [vmem:[%s166 + $0x54] sm:$0xf]
      %v197 = vld [vmem:[%s166 + $0x58] sm:$0xf]
      %v198 = vld [vmem:[%s166 + $0x5c] sm:$0xf]
      %v199 = vld [vmem:[%s166 + $0x60] sm:$0xf]
      %v200 = vld [vmem:[%s166 + $0x64] sm:$0xf]
      %v201 = vld [vmem:[%s166 + $0x68] sm:$0xf]
      %v202 = vld [vmem:[%s166 + $0x6c] sm:$0xf]
      %v203 = vld [vmem:[%s166 + $0x70] sm:$0xf]
      %v204 = vld [vmem:[%s166 + $0x74] sm:$0xf]
      %v205 = vld [vmem:[%s166 + $0x78] sm:$0xf]
      %v206 = vld [vmem:[%s166 + $0x7c] sm:$0xf]
      %v207 = vld [vmem:[%s1] sm:$0xf]
      %v208 = vld [vmem:[%s1 + $0x4] sm:$0xf]
      %v209 = vld [vmem:[%s1 + $0x8] sm:$0xf]
      %v210 = vld [vmem:[%s1 + $0xc] sm:$0xf]
      %v211 = vld [vmem:[%s1 + $0x10] sm:$0xf]
      %v212 = vld [vmem:[%s1 + $0x14] sm:$0xf]
      %v213 = vld [vmem:[%s1 + $0x18] sm:$0x1]
      %v214 = vld [vmem:[%s2] sm:$0x1]
      %v216 = vperm.slane %v214, 0
      %v250 = vunpack.c.l.b16 %v175
      %v251 = vunpack.c.l.b16 %v176
      %v252 = vunpack.c.l.b16 %v177
      %v253 = vunpack.c.l.b16 %v178
      %v254 = vunpack.c.l.b16 %v179
      %v255 = vunpack.c.l.b16 %v180
      %v256 = vunpack.c.l.b16 %v181
      %v257 = vunpack.c.l.b16 %v182
      %v258 = vunpack.c.l.b16 %v183
      %v259 = vunpack.c.l.b16 %v184
      %v260 = vunpack.c.l.b16 %v185
      %v261 = vunpack.c.l.b16 %v186
      %v262 = vunpack.c.l.b16 %v187
      %v263 = vunpack.c.l.b16 %v188
      %v264 = vunpack.c.l.b16 %v189
      %v265 = vunpack.c.l.b16 %v190
      %v266 = vunpack.c.l.b16 %v191
      %v267 = vunpack.c.l.b16 %v192
      %v268 = vunpack.c.l.b16 %v193
      %v269 = vunpack.c.l.b16 %v194
      %v270 = vunpack.c.l.b16 %v195
      %v271 = vunpack.c.l.b16 %v196
      %v272 = vunpack.c.l.b16 %v197
      %v273 = vunpack.c.l.b16 %v198
      %v274 = vunpack.c.l.b16 %v199
      %v275 = vunpack.c.l.b16 %v200
      %v276 = vunpack.c.l.b16 %v201
      %v277 = vunpack.c.l.b16 %v202
      %v278 = vunpack.c.l.b16 %v203
      %v279 = vunpack.c.l.b16 %v204
      %v280 = vunpack.c.l.b16 %v205
      %v281 = vunpack.c.l.b16 %v206
      %v282 = vpack.c.b16 %v251, %v250
      %v283 = vpack.c.b16 %v253, %v252
      %v284 = vpack.c.b16 %v255, %v254
      %v285 = vpack.c.b16 %v257, %v256
      %v286 = vpack.c.b16 %v259, %v258
      %v287 = vpack.c.b16 %v261, %v260
      %v288 = vpack.c.b16 %v263, %v262
      %v289 = vpack.c.b16 %v265, %v264
      %v290 = vpack.c.b16 %v267, %v266
      %v291 = vpack.c.b16 %v269, %v268
      %v292 = vpack.c.b16 %v271, %v270
      %v293 = vpack.c.b16 %v273, %v272
      %v294 = vpack.c.b16 %v275, %v274
      %v295 = vpack.c.b16 %v277, %v276
      %v296 = vpack.c.b16 %v279, %v278
      %v297 = vpack.c.b16 %v281, %v280
      %v305 = vunpack.c.l.b16 %v207
      %v306 = vunpack.c.l.b16 %v208
      %v307 = vunpack.c.l.b16 %v209
      %v308 = vunpack.c.l.b16 %v210
      %v309 = vunpack.c.l.b16 %v211
      %v310 = vunpack.c.l.b16 %v212
      %v311 = vunpack.c.l.b16 %v213
      %v312 = vpack.c.b16 %v306, %v305
      %v313 = vpack.c.b16 %v308, %v307
      %v314 = vpack.c.b16 %v310, %v309
      %v315 = vpack.c.b16 %v311, %v311
      %vm319 = vcmask 408576
      %v321 = vsel %vm319, %v282, 0
      %v324 = vsel %vm319, %v283, 0
      %v327 = vsel %vm319, %v284, 0
      %v330 = vsel %vm319, %v285, 0
      %v333 = vsel %vm319, %v286, 0
      %v336 = vsel %vm319, %v287, 0
      %v339 = vsel %vm319, %v288, 0
      %v342 = vsel %vm319, %v289, 0
      %v345 = vsel %vm319, %v290, 0
      %v348 = vsel %vm319, %v291, 0
      %v351 = vsel %vm319, %v292, 0
      %v354 = vsel %vm319, %v293, 0
      %v357 = vsel %vm319, %v294, 0
      %v360 = vsel %vm319, %v295, 0
      %v363 = vsel %vm319, %v296, 0
      %v366 = vsel %vm319, %v297, 0
      %vm368 = vcmask 1040384
      %v370 = vsel %vm368, %v315, 0
      %372 = vmatpush.bf16.msra.mxu0 0
      %373 = vmatpush.bf16.msra.mxu0 0
      %374 = vmatpush.bf16.msra.mxu0 0
      %375 = vmatpush.bf16.msra.mxu0 0
      %376 = vmatpush.bf16.msra.mxu0 %v370
      %377 = vmatpush.bf16.msra.mxu0 %v314
      %378 = vmatpush.bf16.msra.mxu0 %v313
      %379 = vmatpush.bf16.msra.mxu0 %v312
      %380 = vmatmul.bf16.gmra.mxu0 %v321
      %v381 = vpop.f32.mrf.mxu0
      %v382 = vadd.f32 %v216, %v381
      %v383 = vpop.f32.mrf.mxu0
      %v384 = vadd.f32 %v216, %v383
      %385 = vmatmul.bf16.gmra.mxu0 %v324
      %v386 = vpop.f32.mrf.mxu0
      %v387 = vadd.f32 %v216, %v386
      %v388 = vpop.f32.mrf.mxu0
      %v389 = vadd.f32 %v216, %v388
      %390 = vmatmul.bf16.gmra.mxu0 %v327
      %v391 = vpop.f32.mrf.mxu0
      %v392 = vadd.f32 %v216, %v391
      %v393 = vpop.f32.mrf.mxu0
      %v394 = vadd.f32 %v216, %v393
      %395 = vmatmul.bf16.gmra.mxu0 %v330
      %v396 = vpop.f32.mrf.mxu0
      %v397 = vadd.f32 %v216, %v396
      %v398 = vpop.f32.mrf.mxu0
      %v399 = vadd.f32 %v216, %v398
      %400 = vmatmul.bf16.gmra.mxu0 %v333
      %v401 = vpop.f32.mrf.mxu0
      %v402 = vadd.f32 %v216, %v401
      %v403 = vpop.f32.mrf.mxu0
      %v404 = vadd.f32 %v216, %v403
      %405 = vmatmul.bf16.gmra.mxu0 %v336
      %v406 = vpop.f32.mrf.mxu0
      %v407 = vadd.f32 %v216, %v406
      %v408 = vpop.f32.mrf.mxu0
      %v409 = vadd.f32 %v216, %v408
      %410 = vmatmul.bf16.gmra.mxu0 %v339
      %v411 = vpop.f32.mrf.mxu0
      %v412 = vadd.f32 %v216, %v411
      %v413 = vpop.f32.mrf.mxu0
      %v414 = vadd.f32 %v216, %v413
      %415 = vmatmul.bf16.gmra.mxu0 %v342
      %v416 = vpop.f32.mrf.mxu0
      %v417 = vadd.f32 %v216, %v416
      %v418 = vpop.f32.mrf.mxu0
      %v419 = vadd.f32 %v216, %v418
      %420 = vmatmul.bf16.gmra.mxu0 %v345
      %v421 = vpop.f32.mrf.mxu0
      %v422 = vadd.f32 %v216, %v421
      %v423 = vpop.f32.mrf.mxu0
      %v424 = vadd.f32 %v216, %v423
      %425 = vmatmul.bf16.gmra.mxu0 %v348
      %v426 = vpop.f32.mrf.mxu0
      %v427 = vadd.f32 %v216, %v426
      %v428 = vpop.f32.mrf.mxu0
      %v429 = vadd.f32 %v216, %v428
      %430 = vmatmul.bf16.gmra.mxu0 %v351
      %v431 = vpop.f32.mrf.mxu0
      %v432 = vadd.f32 %v216, %v431
      %v433 = vpop.f32.mrf.mxu0
      %v434 = vadd.f32 %v216, %v433
      %435 = vmatmul.bf16.gmra.mxu0 %v354
      %v436 = vpop.f32.mrf.mxu0
      %v437 = vadd.f32 %v216, %v436
      %v438 = vpop.f32.mrf.mxu0
      %v439 = vadd.f32 %v216, %v438
      %440 = vmatmul.bf16.gmra.mxu0 %v357
      %v441 = vpop.f32.mrf.mxu0
      %v442 = vadd.f32 %v216, %v441
      %v443 = vpop.f32.mrf.mxu0
      %v444 = vadd.f32 %v216, %v443
      %445 = vmatmul.bf16.gmra.mxu0 %v360
      %v446 = vpop.f32.mrf.mxu0
      %v447 = vadd.f32 %v216, %v446
      %v448 = vpop.f32.mrf.mxu0
      %v449 = vadd.f32 %v216, %v448
      %450 = vmatmul.bf16.gmra.mxu0 %v363
      %v451 = vpop.f32.mrf.mxu0
      %v452 = vadd.f32 %v216, %v451
      %v453 = vpop.f32.mrf.mxu0
      %v454 = vadd.f32 %v216, %v453
      %455 = vmatmul.bf16.gmra.mxu0 %v366
      %v456 = vpop.f32.mrf.mxu0
      %v457 = vadd.f32 %v216, %v456
      %v458 = vpop.f32.mrf.mxu0
      %v459 = vadd.f32 %v216, %v458
      %460 = vdwg.mxu0
      %vm461 = vcmask 48128
      %462 = vst.msk [vmem:[%s172] sm:$0xff] %vm461, %v382
      %463 = vst.msk [vmem:[%s172 + $0x8] sm:$0xff] %vm461, %v384
      %464 = vst.msk [vmem:[%s172 + $0x10] sm:$0xff] %vm461, %v387
      %465 = vst.msk [vmem:[%s172 + $0x18] sm:$0xff] %vm461, %v389
      %466 = vst.msk [vmem:[%s172 + $0x20] sm:$0xff] %vm461, %v392
      %467 = vst.msk [vmem:[%s172 + $0x28] sm:$0xff] %vm461, %v394
      %468 = vst.msk [vmem:[%s172 + $0x30] sm:$0xff] %vm461, %v397
      %469 = vst.msk [vmem:[%s172 + $0x38] sm:$0xff] %vm461, %v399
      %470 = vst.msk [vmem:[%s172 + $0x40] sm:$0xff] %vm461, %v402
      %471 = vst.msk [vmem:[%s172 + $0x48] sm:$0xff] %vm461, %v404
      %472 = vst.msk [vmem:[%s172 + $0x50] sm:$0xff] %vm461, %v407
      %473 = vst.msk [vmem:[%s172 + $0x58] sm:$0xff] %vm461, %v409
      %474 = vst.msk [vmem:[%s172 + $0x60] sm:$0xff] %vm461, %v412
      %475 = vst.msk [vmem:[%s172 + $0x68] sm:$0xff] %vm461, %v414
      %476 = vst.msk [vmem:[%s172 + $0x70] sm:$0xff] %vm461, %v417
      %477 = vst.msk [vmem:[%s172 + $0x78] sm:$0xff] %vm461, %v419
      %478 = vst.msk [vmem:[%s172 + $0x80] sm:$0xff] %vm461, %v422
      %479 = vst.msk [vmem:[%s172 + $0x88] sm:$0xff] %vm461, %v424
      %480 = vst.msk [vmem:[%s172 + $0x90] sm:$0xff] %vm461, %v427
      %481 = vst.msk [vmem:[%s172 + $0x98] sm:$0xff] %vm461, %v429
      %482 = vst.msk [vmem:[%s172 + $0xa0] sm:$0xff] %vm461, %v432
      %483 = vst.msk [vmem:[%s172 + $0xa8] sm:$0xff] %vm461, %v434
      %484 = vst.msk [vmem:[%s172 + $0xb0] sm:$0xff] %vm461, %v437
      %485 = vst.msk [vmem:[%s172 + $0xb8] sm:$0xff] %vm461, %v439
      %486 = vst.msk [vmem:[%s172 + $0xc0] sm:$0xff] %vm461, %v442
      %487 = vst.msk [vmem:[%s172 + $0xc8] sm:$0xff] %vm461, %v444
      %488 = vst.msk [vmem:[%s172 + $0xd0] sm:$0xff] %vm461, %v447
      %489 = vst.msk [vmem:[%s172 + $0xd8] sm:$0xff] %vm461, %v449
      %490 = vst.msk [vmem:[%s172 + $0xe0] sm:$0xff] %vm461, %v452
      %491 = vst.msk [vmem:[%s172 + $0xe8] sm:$0xff] %vm461, %v454
      %492 = vst.msk [vmem:[%s172 + $0xf0] sm:$0xff] %vm461, %v457
      %493 = vst.msk [vmem:[%s172 + $0xf8] sm:$0xff] %vm461, %v459
      %s494 = smul.u32 32, %s14
      %p495 = scmp.lt.s32.totalorder %s494, 95
      %s496 = scalar_select %p495, %s494, 95
      %s497 = smul.addr %s496, 8
      %s498 = scalar_lea.vmem %s3, %s497
      // Predicated region
      $region33: #{detection_loss.6} parent=31 // pred_check
        %p499 = pneg %p100
      $region34: #{detection_loss.6} parent=31 // pred_check_branch
        %501 = sbr.rel (%p499) target = $region36
      $region35: #{detection_loss.6} parent=31 // pred_region
        %s502 = smul.u32 32, %s14
      $region36: #{detection_loss.6} parent=31 // pred_fallthru
        _
    $region32: #{detection_loss.6} parent=5 // pred_fallthru
      _
    %p503 = scmp.le.s32.totalorder 2, %s9
    // Predicated region
    $region37: #{detection_loss.6} parent=5 // pred_check
      %p504 = pneg %p503
    $region38: #{detection_loss.6} parent=5 // pred_check_branch
      %506 = sbr.rel (%p504) target = $region40
    $region39: #{detection_loss.6} parent=5 // pred_region
      %s507 = ssub.s32 %s9, 2
      // Predicated region
      $region41: #{detection_loss.6} parent=39 // pred_check
        %p508 = pneg %p106
      $region42: #{detection_loss.6} parent=39 // pred_check_branch
        %510 = sbr.rel (%p508) target = $region44
      $region43: #{detection_loss.6} parent=39 // pred_region
        %s511 = smul.u32 32, %s15
        %p512 = scmp.lt.s32.totalorder %s511, 95
        %s513 = scalar_select %p512, %s511, 95
        %s514 = smul.addr %s513, 8
        %s515 = scalar_lea.vmem %s3, %s514
      $region44: #{detection_loss.6} parent=39 // pred_fallthru
        _
    $region40: #{detection_loss.6} parent=5 // pred_fallthru
      _
  $region6: #{detection_loss.6} parent=0 // loop_footer
    %s13 = sadd.s32 1, %s9
  $region7: #{detection_loss.6} parent=0 // loop_footer_branch
    %8 = sbr.rel target = $region3
  $region8: #{detection_loss.6} parent=0 // loop_exit
    _

// kernel: detection_loss.7
$region0: #{detection_loss.7}
  #allocation0 [shape = 'u32[]', space=smem, size = 0x4, offset = 0x4, fixed_abs, tag = 'smem constant byte address 0x4 - core index']
  #allocation1 [shape = 'u32[72,128]{1,0:T(1,128)}', space=vmem, size = 0x9000, scoped, tag = 'internal scratch']
  %s0 = inlined_call_operand.vmem [shape: f32[2,4], index: 0, kind: input, shape index: {}]
  %s1 = inlined_call_operand.vmem [shape: s32[2], index: 1, kind: input, shape index: {}]
  %s2 = inlined_call_operand.vmem [shape: f32[2,2,4,256], index: 2, kind: input, shape index: {}]
  %s3 = inlined_call_operand.vmem [shape: f32[2,2,2,256], index: 3, kind: input, shape index: {}]
  %s4 = inlined_call_operand.vmem [shape: f32[2,4,256], index: 4, kind: input, shape index: {}]
  %s5 = inlined_call_operand.vmem [shape: f32[2,2,1,128], index: 5, kind: output, shape index: {}]
  %s6 = sld [smem:[#allocation0]]
  $region61: #{detection_loss.7} parent=0
    _
  %s8 = ssub.s32 1, %s6
  %s9 = scalar_select 0, %s8, %s6
  $region1: #{detection_loss.7} parent=0
    #allocation2 [shape = 'u8[1024]{0}', space=smem, size = 0x400, scoped, tag = 'input window, operand 0, single buffered']
    #allocation3 [shape = 's32[2]{0}', space=sflag, size = 0x8, scoped, tag = 'scoped memory for detection_loss.7']
    #allocation4 [shape = 'u8[512]{0}', space=smem, size = 0x200, scoped, tag = 'input window, operand 1, single buffered']
    #allocation5 [shape = 's32[1]{0}', space=sflag, size = 0x4, scoped, tag = 'scoped memory for detection_loss.7']
    %10 = vsyncpa [#allocation3], 0
    %11 = vsyncpa [#allocation5], 0
    loop: start=0, step=1, limit=6
    $region2: #{detection_loss.7} parent=1 // loop_pre_header
      _
    $region3: #{detection_loss.7} parent=1 // loop_header
      %s13 = sphi 0, %s17
      %p14 = scmp.ge.s32.totalorder %s13, 6
      %s20 = sphi 0, %s32
      %s21 = sphi 0, %s28
      %s22 = sphi 0, %s20
      %s23 = sphi 0, %s21
      %s24 = sphi 0, %s22
      %s25 = sphi 0, %s23
      %s33 = sphi 0, %s33
      %s35 = sphi 0, %s33
      %s36 = sphi 0, %s35
      %s50 = sphi 0, %s36
      %s54 = sphi 0, %s54
      %s56 = sphi 0, %s54
      %s57 = sphi 0, %s56
      %s71 = sphi 0, %s57
      %s79 = sphi 0, %s81
      %s82 = sphi 0, %s79
      %s83 = sphi 0, %s82
      %s99 = sphi 0, %s83
      %s107 = sphi 0, %s109
      %s110 = sphi 0, %s107
      %s111 = sphi 0, %s110
      %s127 = sphi 0, %s111
      %s133 = sphi 0, %s135
      %s136 = sphi 0, %s133
      %s137 = sphi 0, %s136
      %s153 = sphi 0, %s137
      %s161 = sphi 0, %s163
      %s164 = sphi 0, %s161
      %s165 = sphi 0, %s164
      %s181 = sphi 0, %s165
    $region4: #{detection_loss.7} parent=1 // loop_header_branch
      %16 = sbr.rel (%p14) target = $region8
    $region5: #{detection_loss.7} parent=1 // loop_body
      %s18 = ssub.s32 %s13, 1
      %s19 = ssub.s32 %s13, 2
      %s26 = sadd.s32 1, %s21
      %p27 = scmp.ge.s32.totalorder %s26, 2
      %s28 = scalar_select %p27, 0, %s26
      %s29 = sadd.s32 1, %s20
      %s30 = scalar_select %p27, %s29, %s20
      %p31 = scmp.ge.s32.totalorder %s30, 2
      %s32 = scalar_select %p31, 0, %s30
      %s34 = sadd.s32 %s33, 1
      %p37 = scmp.eq.s32.totalorder %s13, 3
      %p38 = scmp.ne.s32.totalorder %s33, %s35
      %p39 = scmp.eq.s32.totalorder %s13, 0
      %p40 = por %p38, %p39
      %p41 = scmp.ne.s32.totalorder %s33, %s35
      %p42 = scmp.eq.s32.totalorder %s18, 3
      %p43 = por %p41, %p42
      %p44 = scmp.ne.s32.totalorder %s35, %s36
      %p45 = scmp.eq.s32.totalorder %s18, 0
      %p46 = por %p44, %p45
      %p47 = scmp.ne.s32.totalorder %s35, %s36
      %p48 = scmp.eq.s32.totalorder %s19, 3
      %p49 = por %p47, %p48
      %p51 = scmp.ne.s32.totalorder %s36, %s50
      %p52 = scmp.eq.s32.totalorder %s19, 0
      %p53 = por %p51, %p52
      %s55 = sadd.s32 %s54, 1
      %p58 = scmp.eq.s32.totalorder %s13, 3
      %p59 = scmp.ne.s32.totalorder %s54, %s56
      %p60 = scmp.eq.s32.totalorder %s13, 0
      %p61 = por %p59, %p60
      %p62 = scmp.ne.s32.totalorder %s54, %s56
      %p63 = scmp.eq.s32.totalorder %s18, 3
      %p64 = por %p62, %p63
      %p65 = scmp.ne.s32.totalorder %s56, %s57
      %p66 = scmp.eq.s32.totalorder %s18, 0
      %p67 = por %p65, %p66
      %p68 = scmp.ne.s32.totalorder %s56, %s57
      %p69 = scmp.eq.s32.totalorder %s19, 3
      %p70 = por %p68, %p69
      %p72 = scmp.ne.s32.totalorder %s57, %s71
      %p73 = scmp.eq.s32.totalorder %s19, 0
      %p74 = por %p72, %p73
      %s75 = ssub.s32 %s20, %s32
      %s76 = ssub.s32 %s21, %s28
      %s77 = sor.u32 %s75, %s76
      %p78 = scmp.eq.s32.totalorder %s77, 0
      %s80 = sadd.s32 %s79, 1
      %s81 = scalar_select %p78, %s79, %s80
      %p84 = pneg %p78
      %p85 = scmp.eq.s32.totalorder %s13, 3
      %p86 = por %p84, %p85
      %p87 = scmp.ne.s32.totalorder %s79, %s82
      %p88 = scmp.eq.s32.totalorder %s13, 0
      %p89 = por %p87, %p88
      %p90 = scmp.ne.s32.totalorder %s79, %s82
      %p91 = scmp.eq.s32.totalorder %s18, 3
      %p92 = por %p90, %p91
      %p93 = scmp.ne.s32.totalorder %s82, %s83
      %p94 = scmp.eq.s32.totalorder %s18, 0
      %p95 = por %p93, %p94
      %p96 = scmp.ne.s32.totalorder %s82, %s83
      %p97 = scmp.eq.s32.totalorder %s19, 3
      %p98 = por %p96, %p97
      %p100 = scmp.ne.s32.totalorder %s83, %s99
      %p101 = scmp.eq.s32.totalorder %s19, 0
      %p102 = por %p100, %p101
      %s103 = ssub.s32 %s20, %s32
      %s104 = ssub.s32 %s21, %s28
      %s105 = sor.u32 %s103, %s104
      %p106 = scmp.eq.s32.totalorder %s105, 0
      %s108 = sadd.s32 %s107, 1
      %s109 = scalar_select %p106, %s107, %s108
      %p112 = pneg %p106
      %p113 = scmp.eq.s32.totalorder %s13, 3
      %p114 = por %p112, %p113
      %p115 = scmp.ne.s32.totalorder %s107, %s110
      %p116 = scmp.eq.s32.totalorder %s13, 0
      %p117 = por %p115, %p116
      %p118 = scmp.ne.s32.totalorder %s107, %s110
      %p119 = scmp.eq.s32.totalorder %s18, 3
      %p120 = por %p118, %p119
      %p121 = scmp.ne.s32.totalorder %s110, %s111
      %p122 = scmp.eq.s32.totalorder %s18, 0
      %p123 = por %p121, %p122
      %p124 = scmp.ne.s32.totalorder %s110, %s111
      %p125 = scmp.eq.s32.totalorder %s19, 3
      %p126 = por %p124, %p125
      %p128 = scmp.ne.s32.totalorder %s111, %s127
      %p129 = scmp.eq.s32.totalorder %s19, 0
      %p130 = por %p128, %p129
      %s131 = ssub.s32 %s21, %s28
      %p132 = scmp.eq.s32.totalorder %s131, 0
      %s134 = sadd.s32 %s133, 1
      %s135 = scalar_select %p132, %s133, %s134
      %p138 = pneg %p132
      %p139 = scmp.eq.s32.totalorder %s13, 3
      %p140 = por %p138, %p139
      %p141 = scmp.ne.s32.totalorder %s133, %s136
      %p142 = scmp.eq.s32.totalorder %s13, 0
      %p143 = por %p141, %p142
      %p144 = scmp.ne.s32.totalorder %s133, %s136
      %p145 = scmp.eq.s32.totalorder %s18, 3
      %p146 = por %p144, %p145
      %p147 = scmp.ne.s32.totalorder %s136, %s137
      %p148 = scmp.eq.s32.totalorder %s18, 0
      %p149 = por %p147, %p148
      %p150 = scmp.ne.s32.totalorder %s136, %s137
      %p151 = scmp.eq.s32.totalorder %s19, 3
      %p152 = por %p150, %p151
      %p154 = scmp.ne.s32.totalorder %s137, %s153
      %p155 = scmp.eq.s32.totalorder %s19, 0
      %p156 = por %p154, %p155
      %s157 = ssub.s32 %s20, %s32
      %s158 = ssub.s32 %s21, %s28
      %s159 = sor.u32 %s157, %s158
      %p160 = scmp.eq.s32.totalorder %s159, 0
      %s162 = sadd.s32 %s161, 1
      %s163 = scalar_select %p160, %s161, %s162
      %p166 = pneg %p160
      %p167 = scmp.eq.s32.totalorder %s13, 3
      %p168 = por %p166, %p167
      %p169 = scmp.ne.s32.totalorder %s161, %s164
      %p170 = scmp.eq.s32.totalorder %s13, 0
      %p171 = por %p169, %p170
      %p172 = scmp.ne.s32.totalorder %s161, %s164
      %p173 = scmp.eq.s32.totalorder %s18, 3
      %p174 = por %p172, %p173
      %p175 = scmp.ne.s32.totalorder %s164, %s165
      %p176 = scmp.eq.s32.totalorder %s18, 0
      %p177 = por %p175, %p176
      %p178 = scmp.ne.s32.totalorder %s164, %s165
      %p179 = scmp.eq.s32.totalorder %s19, 3
      %p180 = por %p178, %p179
      %p182 = scmp.ne.s32.totalorder %s165, %s181
      %p183 = scmp.eq.s32.totalorder %s19, 0
      %p184 = por %p182, %p183
      %p185 = scmp.le.s32.totalorder 1, %s13
      %p186 = scmp.lt.s32.totalorder %s13, 5
      %p187 = pnand %p185, %p186
      %p188 = pneg %p187
      // Predicated region
      $region9: #{detection_loss.7} parent=5 // pred_check
        _
      $region10: #{detection_loss.7} parent=5 // pred_check_branch
        %190 = sbr.rel (%p187) target = $region12
      $region11: #{detection_loss.7} parent=5 // pred_region
        %s191 = ssub.s32 %s13, 1
        // Predicated region
        $region13: #{detection_loss.7} parent=11 // pred_check
          %p192 = pneg %p46
        $region14: #{detection_loss.7} parent=11 // pred_check_branch
          %194 = sbr.rel (%p192) target = $region16
        $region15: #{detection_loss.7} parent=11 // pred_region
          %196 = vsyncadd [#allocation3], 0
          %s198 = sshll.u32 %s0, 4
          %s199 = int_to_ptr.vmem [resolvable:$true] %s198
          %201 = dma.vmem_to_smem %s199, 32, [#allocation2], [#allocation3]
        $region16: #{detection_loss.7} parent=11 // pred_fallthru
          _
        // Predicated region
        $region17: #{detection_loss.7} parent=11 // pred_check
          %p202 = pneg %p67
        $region18: #{detection_loss.7} parent=11 // pred_check_branch
          %204 = sbr.rel (%p202) target = $region20
        $region19: #{detection_loss.7} parent=11 // pred_region
          %206 = vsyncadd [#allocation5], 0
          %s208 = sshll.u32 %s1, 4
          %s209 = int_to_ptr.vmem [resolvable:$true] %s208
          %211 = dma.vmem_to_smem %s209, 16, [#allocation4], [#allocation5]
        $region20: #{detection_loss.7} parent=11 // pred_fallthru
          _
      $region12: #{detection_loss.7} parent=5 // pred_fallthru
        _
      %p212 = scmp.lt.s32.totalorder %s13, 4
      // Predicated region
      $region21: #{detection_loss.7} parent=5 // pred_check
        %p213 = pneg %p212
      $region22: #{detection_loss.7} parent=5 // pred_check_branch
        %215 = sbr.rel (%p213) target = $region24
      $region23: #{detection_loss.7} parent=5 // pred_region
        // Predicated region
        $region25: #{detection_loss.7} parent=23 // pred_check
          %p216 = pneg %p89
        $region26: #{detection_loss.7} parent=23 // pred_check_branch
          %218 = sbr.rel (%p216) target = $region28
        $region27: #{detection_loss.7} parent=23 // pred_region
          %p219 = scmp.lt.s32.totalorder %s20, 1
          %s220 = scalar_select %p219, %s20, 1
          %p221 = scmp.lt.s32.totalorder %s21, 1
          %s222 = scalar_select %p221, %s21, 1
          %s223 = smul.addr %s222, 2
          %s224 = smul.addr %s220, 4
          %s225 = sadd.s32 %s223, %s224
          %s226 = smul.addr %s225, 4
          %s227 = scalar_lea.vmem %s2, %s226
        $region28: #{detection_loss.7} parent=23 // pred_fallthru
          _
        // Predicated region
        $region29: #{detection_loss.7} parent=23 // pred_check
          %p228 = pneg %p117
        $region30: #{detection_loss.7} parent=23 // pred_check_branch
          %230 = sbr.rel (%p228) target = $region32
        $region31: #{detection_loss.7} parent=23 // pred_region
          %p231 = scmp.lt.s32.totalorder %s20, 1
          %s232 = scalar_select %p231, %s20, 1
          %p233 = scmp.lt.s32.totalorder %s21, 1
          %s234 = scalar_select %p233, %s21, 1
          %s235 = smul.addr %s234, 2
          %s236 = smul.addr %s232, 4
          %s237 = sadd.s32 %s235, %s236
          %s238 = smul.addr %s237, 2
          %s239 = scalar_lea.vmem %s3, %s238
        $region32: #{detection_loss.7} parent=23 // pred_fallthru
          _
        // Predicated region
        $region33: #{detection_loss.7} parent=23 // pred_check
          %p240 = pneg %p143
        $region34: #{detection_loss.7} parent=23 // pred_check_branch
          %242 = sbr.rel (%p240) target = $region36
        $region35: #{detection_loss.7} parent=23 // pred_region
          %p243 = scmp.lt.s32.totalorder %s21, 1
          %s244 = scalar_select %p243, %s21, 1
          %s245 = smul.addr %s244, 2
          %s246 = smul.addr %s245, 4
          %s247 = scalar_lea.vmem %s4, %s246
        $region36: #{detection_loss.7} parent=23 // pred_fallthru
          _
      $region24: #{detection_loss.7} parent=5 // pred_fallthru
        _
      %p248 = scmp.le.s32.totalorder 1, %s13
      %p249 = scmp.lt.s32.totalorder %s13, 5
      %p250 = pnand %p248, %p249
      %p251 = pneg %p250
      // Predicated region
      $region37: #{detection_loss.7} parent=5 // pred_check
        _
      $region38: #{detection_loss.7} parent=5 // pred_check_branch
        %253 = sbr.rel (%p250) target = $region40
      $region39: #{detection_loss.7} parent=5 // pred_region
        %s254 = ssub.s32 %s13, 1
        // Predicated region
        $region41: #{detection_loss.7} parent=39 // pred_check
          %p255 = pneg %p46
        $region42: #{detection_loss.7} parent=39 // pred_check_branch
          %257 = sbr.rel (%p255) target = $region44
        $region43: #{detection_loss.7} parent=39 // pred_region
          %259 = dma.done [#allocation3], 32
        $region44: #{detection_loss.7} parent=39 // pred_fallthru
          _
        // Predicated region
        $region45: #{detection_loss.7} parent=39 // pred_check
          %p260 = pneg %p67
        $region46: #{detection_loss.7} parent=39 // pred_check_branch
          %262 = sbr.rel (%p260) target = $region48
        $region47: #{detection_loss.7} parent=39 // pred_region
          %264 = dma.done [#allocation5], 16
        $region48: #{detection_loss.7} parent=39 // pred_fallthru
          _
        %265 = sfence
        %p266 = pneg %p46
        %p267 = pneg %p43
        %p268 = pneg %p67
        %p269 = pneg %p64
        %p270 = scmp.lt.s32.totalorder %s22, 1
        %s271 = scalar_select %p270, %s22, 1
        %p272 = scmp.lt.s32.totalorder %s23, 1
        %s273 = scalar_select %p272, %s23, 1
        %s274 = smul.addr %s273, 2
        %s275 = smul.addr %s271, 4
        %s276 = sadd.s32 %s274, %s275
        %s277 = smul.addr %s276, 4
        %s278 = scalar_lea.vmem %s2, %s277
        %p279 = pneg %p95
        %p280 = pneg %p92
        %p281 = scmp.lt.s32.totalorder %s22, 1
        %s282 = scalar_select %p281, %s22, 1
        %p283 = scmp.lt.s32.totalorder %s23, 1
        %s284 = scalar_select %p283, %s23, 1
        %s285 = smul.addr %s284, 2
        %s286 = smul.addr %s282, 4
        %s287 = sadd.s32 %s285, %s286
        %s288 = smul.addr %s287, 2
        %s289 = scalar_lea.vmem %s3, %s288
        %p290 = pneg %p123
        %p291 = pneg %p120
        %p292 = scmp.lt.s32.totalorder %s23, 1
        %s293 = scalar_select %p292, %s23, 1
        %s294 = smul.addr %s293, 2
        %s295 = smul.addr %s294, 4
        %s296 = scalar_lea.vmem %s4, %s295
        %p297 = pneg %p149
        %p298 = pneg %p146
        %p299 = pneg %p177
        %p300 = pneg %p174
        %p301 = scmp.lt.s32.totalorder %s22, 1
        %s302 = scalar_select %p301, %s22, 1
        %p303 = scmp.lt.s32.totalorder %s23, 1
        %s304 = scalar_select %p303, %s23, 1
        %s305 = smul.addr %s302, 2
        %s306 = sadd.s32 %s304, %s305
        %s307 = scalar_lea.vmem %s5, %s306
        %p308 = scmp.lt.s32.totalorder %s22, 1
        %s309 = scalar_select %p308, %s22, 1
        %p310 = scmp.lt.s32.totalorder %s23, 1
        %s311 = scalar_select %p310, %s23, 1
        %s312 = smul.addr %s311, 2
        %s313 = smul.addr %s309, 4
        %s314 = sadd.s32 %s312, %s313
        %s315 = smul.addr %s314, 4
        %s316 = scalar_lea.vmem %s2, %s315
        %p317 = scmp.lt.s32.totalorder %s22, 1
        %s318 = scalar_select %p317, %s22, 1
        %p319 = scmp.lt.s32.totalorder %s23, 1
        %s320 = scalar_select %p319, %s23, 1
        %s321 = smul.addr %s320, 2
        %s322 = smul.addr %s318, 4
        %s323 = sadd.s32 %s321, %s322
        %s324 = smul.addr %s323, 2
        %s325 = scalar_lea.vmem %s3, %s324
        %p326 = scmp.lt.s32.totalorder %s23, 1
        %s327 = scalar_select %p326, %s23, 1
        %s328 = smul.addr %s327, 2
        %s329 = smul.addr %s328, 4
        %s330 = scalar_lea.vmem %s4, %s329
        %p331 = scmp.lt.s32.totalorder %s22, 1
        %s332 = scalar_select %p331, %s22, 1
        %p333 = scmp.lt.s32.totalorder %s23, 1
        %s334 = scalar_select %p333, %s23, 1
        %s335 = smul.addr %s332, 2
        %s336 = sadd.s32 %s334, %s335
        %s337 = scalar_lea.vmem %s5, %s336
        %v338 = vld [vmem:[%s316] sm:$0xff]
        %v339 = vld [vmem:[%s325] sm:$0xf]
        %v340 = vld [vmem:[%s330] sm:$0xff]
        %v341 = vlaneseq
        %v342 = vand.u32 %v341, 127
        %v343 = vadd.s32 %v342, 128
        %s344 = sld [smem:[#allocation4 + %s23]]
        %v345 = vstv %s344
        %vm346 = vcmp.lt.s32.totalorder %v342, %v345
        %vm347 = vcmp.lt.s32.totalorder %v343, %v345
        %v348 = vsel %vm346, 1, 0
        %v349 = vsel %vm347, 1, 0
        %v350 = vcvt.s32.f32 %v348
        %v351 = vcvt.s32.f32 %v349
        %v352 = vmul.f32 %v340, 0.5
        %v354 = vrot.slane %v352, 6
        %v355 = vrot.slane %v354, 4
        %v357 = vsub.f32 %v340, %v355
        %v358 = vadd.f32 %v340, %v355
        %s359 = smul.u32 %s22, 128
        %s360 = sld [smem:[#allocation2 + %s359]]
        %s361 = sadd.s32 %s359, 1
        %s362 = sld [smem:[#allocation2 + %s361]]
        %s363 = sadd.s32 %s359, 2
        %s364 = sld [smem:[#allocation2 + %s363]]
        %s365 = sadd.s32 %s359, 3
        %s366 = sld [smem:[#allocation2 + %s365]]
        %v367 = vstv %s360
        %v368 = vmax.f32 %v357, %v367
        %v369 = vstv %s362
        %v370 = vmax.f32 %v357, %v369
        %v371 = vstv %s364
        %v372 = vmin.f32 %v358, %v371
        %v373 = vstv %s366
        %v374 = vmin.f32 %v358, %v373
        %v375 = vsub.f32 %v372, %v368
        %v376 = vmax.f32 %v375, 0.0
        %v377 = vsub.f32 %v374, %v370
        %v378 = vmax.f32 %v377, 0.0
        %v380 = vrot.slane %v378, 5
        %v381 = vrot.slane %v380, 4
        %v383 = vmul.f32 %v376, %v381
        %v384 = vsub.f32 %v358, %v357
        %v386 = vrot.slane %v384, 5
        %v387 = vrot.slane %v386, 4
        %v389 = vmul.f32 %v384, %v387
        %s390 = ssub.f32 %s364, %s360
        %s391 = ssub.f32 %s366, %s362
        %s392 = smul.f32 %s390, %s391
        %v393 = vstv %s392
        %v394 = vadd.f32 %v389, %v393
        %v395 = vsub.f32 %v394, %v383
        %v396 = vadd.f32 %v395, 1e-09
        %v397 = vrcp.pop %v396
        %v398 = vmul.f32 %v383, %v397
        %v401 = vrot.slane %v351, 4
        %vm402 = vcmask 1043456
        %v403 = vsel %vm402, %v350, %v401
        %v405 = vmul.f32 %v398, %v403
        %v407 = vperm.slane %v405, 0
        %v408 = vperm.slane %v405, 4
        %vm411 = vcmask 1040384
        %v412 = vsel %vm411, %v407, -inf
        %v413 = vsel %vm411, %v408, -inf
        %v414 = vmax.f32 %v412, %v413
        %415 = vmax.xlane.f32.xlu0 %v414
        %v416 = vpop.xlane.xlu0 %415
        %v417 = vrot.slane %v416, 4
        %v418 = vmax.f32 %v416, %v417
        %v419 = vrot.slane %v418, 2
        %v420 = vmax.f32 %v418, %v419
        %v421 = vrot.slane %v420, 1
        %v422 = vmax.f32 %v420, %v421
        %s423 = vtos %v422
        %v424 = vstv %s423
        %vm425 = vcmp.gt.f32.partialorder %v405, 0.35
        %vm426 = vcmp.gt.f32.partialorder %v424, 0.0
        %v427 = vsub.f32 %v424, 1e-06
        %vm428 = vcmp.ge.f32.partialorder %v405, %v427
        %v429 = vsel %vm426, 1, 0
        %vm430 = vcmp.eq.s32.totalorder %v429, 1
        %vm431 = vmand %vm430, %vm428
        %vm432 = vmor %vm425, %vm431
        %v433 = vsel %vm432, 1, 0
        %v434 = vcvt.s32.f32 %v433
        %v435 = vmul.f32 %v434, %v403
        %v437 = vperm.slane %v435, 0
        %v438 = vperm.slane %v435, 4
        %v441 = vsel %vm411, %v437, 0.0
        %v442 = vsel %vm411, %v438, 0.0
        %v443 = vadd.f32 %v441, %v442
        %444 = vadd.xlane.f32.xlu0 %v443
        %v445 = vpop.xlane.xlu0 %444
        %v446 = vrot.slane %v445, 4
        %v447 = vadd.f32 %v445, %v446
        %v448 = vrot.slane %v447, 2
        %v449 = vadd.f32 %v447, %v448
        %v450 = vrot.slane %v449, 1
        %v451 = vadd.f32 %v449, %v450
        %s452 = vtos %v451
        %v453 = vstv %s452
        %v454 = vmax.f32 %v453, 1.0
        %v455 = vrcp.pop %v454
        %s456 = sadd.f32 %s360, %s364
        %s457 = smul.f32 %s456, 0.5
        %s458 = sadd.f32 %s362, %s366
        %s459 = smul.f32 %s458, 0.5
        %s460 = smax.f32 %s390, 1e-06
        %s461 = smax.f32 %s391, 1e-06
        %v462 = vstv %s457
        %v463 = vsub.f32 %v462, %v340
        %v464 = vmul.f32 %v340, 0.1
        %v465 = vrcp.pop %v464
        %v467 = vrot.slane %v465, 6
        %v468 = vrot.slane %v467, 4
        %v470 = vmul.f32 %v463, %v468
        %v471 = vstv %s459
        %v472 = vsub.f32 %v471, %v340
        %v473 = vmul.f32 %v472, %v468
        %v474 = vrcp.pop %v340
        %v475 = vstv %s460
        %v476 = vmul.f32 %v475, %v474
        %v477 = vlog2.pop %v476
        %v478 = vmul.f32 %v477, 0.6931472
        %v479 = vmul.f32 %v478, 5.0
        %v480 = vstv %s461
        %v481 = vmul.f32 %v480, %v474
        %v482 = vlog2.pop %v481
        %v483 = vmul.f32 %v482, 0.6931472
        %v484 = vmul.f32 %v483, 5.0
        %v486 = vperm.slane %v470, 0
        %v487 = vperm.slane %v470, 4
        %v491 = vperm.slane %v473, 1
        %v492 = vperm.slane %v473, 5
        %v496 = vperm.slane %v479, 2
        %v497 = vperm.slane %v479, 6
        %v501 = vperm.slane %v484, 3
        %v502 = vperm.slane %v484, 7
        %v505 = vsel %vm411, %v486, %v491
        %v506 = vsel %vm411, %v487, %v492
        %vm507 = vcmask 1041408
        %v508 = vsel %vm507, %v505, %v496
        %v509 = vsel %vm507, %v506, %v497
        %vm510 = vcmask 1042432
        %v511 = vsel %vm510, %v508, %v501
        %v512 = vsel %vm510, %v509, %v502
        %v515 = vrot.slane %v512, 4
        %v516 = vsel %vm402, %v511, %v515
        %v518 = vsub.f32 %v338, %v516
        %v519 = vand.u32 2147483647, %v518
        %vm520 = vcmp.lt.f32.partialorder %v519, 1.0
        %v521 = vmul.f32 %v519, 0.5
        %v522 = vmul.f32 %v521, %v519
        %v523 = vsub.f32 %v519, 0.5
        %v524 = vsel %vm520, %v522, %v523
        %v525 = vperm.slane %v437, 0
        %v526 = vperm.slane %v438, 0
        %v529 = vrot.slane %v526, 4
        %v530 = vsel %vm402, %v525, %v529
        %v532 = vmul.f32 %v524, %v530
        %534 = vst [vmem:[#allocation1] ss:$2 sm:$0xff] %v532
        %v535 = vld.sshfl [vmem:[#allocation1] sm:$0xff pattern:$0x75316420]
        %v536 = vld.sshfl [vmem:[#allocation1 + $0x8] sm:$0xff pattern:$0x75316420]
        %v539 = vsel %vm402, %v535, 0.0
        %v540 = vsel %vm402, %v536, 0.0
        %v541 = vadd.f32 %v539, %v540
        %542 = vadd.xlane.f32.xlu0 %v541
        %v543 = vpop.xlane.xlu0 %542
        %v544 = vrot.slane %v543, 4
        %v545 = vadd.f32 %v543, %v544
        %v546 = vrot.slane %v545, 2
        %v547 = vadd.f32 %v545, %v546
        %v548 = vrot.slane %v547, 1
        %v549 = vadd.f32 %v547, %v548
        %s550 = vtos %v549
        %v551 = vstv %s550
        %v552 = vmul.f32 %v551, %v455
        %554 = vst [vmem:[#allocation1] ss:$4 sm:$0xff] %v339
        %v555 = vld.sshfl [vmem:[#allocation1] sm:$0xff pattern:$0x73625140]
        %v556 = vld.sshfl [vmem:[#allocation1 + $0x8] sm:$0xff pattern:$0x73625140]
        %v559 = vsel %vm507, %v555, -inf
        %v560 = vrot.slane %v559, 4
        %v561 = vmax.f32 %v559, %v560
        %v562 = vrot.slane %v561, 2
        %v563 = vmax.f32 %v561, %v562
        %v564 = vrot.slane %v563, 1
        %v565 = vmax.f32 %v563, %v564
        %v566 = vsel %vm507, %v556, -inf
        %v567 = vrot.slane %v566, 4
        %v568 = vmax.f32 %v566, %v567
        %v569 = vrot.slane %v568, 2
        %v570 = vmax.f32 %v568, %v569
        %v571 = vrot.slane %v570, 1
        %v572 = vmax.f32 %v570, %v571
        %v575 = vrot.slane %v572, 6
        %v576 = vsel %vm507, %v565, %v575
        %v578 = vsub.f32 %v339, %v576
        %v579 = vmul.f32 %v578, 1.442695
        %v580 = vpow.pop %v579
        %582 = vst [vmem:[#allocation1] ss:$4 sm:$0xff] %v580
        %v583 = vld.sshfl [vmem:[#allocation1] sm:$0xff pattern:$0x73625140]
        %v584 = vld.sshfl [vmem:[#allocation1 + $0x8] sm:$0xff pattern:$0x73625140]
        %v587 = vsel %vm507, %v583, 0.0
        %v588 = vrot.slane %v587, 4
        %v589 = vadd.f32 %v587, %v588
        %v590 = vrot.slane %v589, 2
        %v591 = vadd.f32 %v589, %v590
        %v592 = vrot.slane %v591, 1
        %v593 = vadd.f32 %v591, %v592
        %v594 = vsel %vm507, %v584, 0.0
        %v595 = vrot.slane %v594, 4
        %v596 = vadd.f32 %v594, %v595
        %v597 = vrot.slane %v596, 2
        %v598 = vadd.f32 %v596, %v597
        %v599 = vrot.slane %v598, 1
        %v600 = vadd.f32 %v598, %v599
        %v601 = vlog2.pop %v593
        %v602 = vmul.f32 %v601, 0.6931472
        %v603 = vlog2.pop %v600
        %v604 = vmul.f32 %v603, 0.6931472
        %v605 = vadd.f32 %v565, %v602
        %v606 = vadd.f32 %v572, %v604
        %v608 = vunpack.c.l.s4 858984721
        %v609 = vunpack.c.0.s8 %v608
        %v610 = vperm.slane %v339, %v609
        %v613 = vunpack.c.l.s4 572653568
        %v614 = vunpack.c.0.s8 %v613
        %v615 = vperm.slane %v339, %v614
        %v617 = vsel %vm432, %v610, %v615
        %v619 = vperm.slane %v617, 0
        %v620 = vperm.slane %v617, 4
        %v623 = vsub.f32 %v605, %v619
        %v624 = vsub.f32 %v606, %v620
        %v625 = vmul.f32 %v623, %v350
        %v626 = vmul.f32 %v624, %v351
        %v627 = vsel %vm411, %v625, 0.0
        %v628 = vsel %vm411, %v626, 0.0
        %v629 = vadd.f32 %v627, %v628
        %630 = vadd.xlane.f32.xlu0 %v629
        %v631 = vpop.xlane.xlu0 %630
        %v632 = vrot.slane %v631, 4
        %v633 = vadd.f32 %v631, %v632
        %v634 = vrot.slane %v633, 2
        %v635 = vadd.f32 %v633, %v634
        %v636 = vrot.slane %v635, 1
        %v637 = vadd.f32 %v635, %v636
        %s638 = vtos %v637
        %v639 = vstv %s638
        %v640 = vmul.f32 %v639, %v455
        %vm641 = vcmp.eq.s32.totalorder %v342, 0
        %v642 = vsel %vm641, %v552, 0.0
        %vm643 = vcmp.eq.s32.totalorder %v342, 1
        %v644 = vsel %vm643, %v640, 0.0
        %v645 = vadd.f32 %v642, %v644
        %646 = vst [vmem:[%s337] sm:$0x1] %v645
        %p647 = scmp.lt.s32.totalorder %s22, 1
        %s648 = scalar_select %p647, %s22, 1
        %p649 = scmp.lt.s32.totalorder %s23, 1
        %s650 = scalar_select %p649, %s23, 1
        %s651 = smul.addr %s648, 2
        %s652 = sadd.s32 %s650, %s651
        %s653 = scalar_lea.vmem %s5, %s652
        // Predicated region
        $region49: #{detection_loss.7} parent=39 // pred_check
          %p654 = pneg %p174
        $region50: #{detection_loss.7} parent=39 // pred_check_branch
          %656 = sbr.rel (%p654) target = $region52
        $region51: #{detection_loss.7} parent=39 // pred_region
          _
        $region52: #{detection_loss.7} parent=39 // pred_fallthru
          _
      $region40: #{detection_loss.7} parent=5 // pred_fallthru
        _
      %p657 = scmp.le.s32.totalorder 2, %s13
      // Predicated region
      $region53: #{detection_loss.7} parent=5 // pred_check
        %p658 = pneg %p657
      $region54: #{detection_loss.7} parent=5 // pred_check_branch
        %660 = sbr.rel (%p658) target = $region56
      $region55: #{detection_loss.7} parent=5 // pred_region
        %s661 = ssub.s32 %s13, 2
        // Predicated region
        $region57: #{detection_loss.7} parent=55 // pred_check
          %p662 = pneg %p180
        $region58: #{detection_loss.7} parent=55 // pred_check_branch
          %664 = sbr.rel (%p662) target = $region60
        $region59: #{detection_loss.7} parent=55 // pred_region
          %p665 = scmp.lt.s32.totalorder %s24, 1
          %s666 = scalar_select %p665, %s24, 1
          %p667 = scmp.lt.s32.totalorder %s25, 1
          %s668 = scalar_select %p667, %s25, 1
          %s669 = smul.addr %s666, 2
          %s670 = sadd.s32 %s668, %s669
          %s671 = scalar_lea.vmem %s5, %s670
        $region60: #{detection_loss.7} parent=55 // pred_fallthru
          _
      $region56: #{detection_loss.7} parent=5 // pred_fallthru
        _
    $region6: #{detection_loss.7} parent=1 // loop_footer
      %s17 = sadd.s32 1, %s13
    $region7: #{detection_loss.7} parent=1 // loop_footer_branch
      %12 = sbr.rel target = $region3
    $region8: #{detection_loss.7} parent=1 // loop_exit
      _
    %672 = vsyncpa [#allocation3], 1
    %s673 = scalar_lea.sflag [#allocation3], 1
    %674 = vsyncpa %s673, 1
    %675 = vsyncpa [#allocation5], 1

</llo_original>
